<compile_context>
chip_gen: v7x
topology: tpu7x:2x2x1
jax: 0.10.0
libtpu: 0.0.40
codegen_flags: <defaults>
</compile_context>

<pallas_src>
import jax
import jax.numpy as jnp
from jax import lax
from jax.experimental import pallas as pl
from jax.experimental.pallas import tpu as pltpu

# ----------------------------- sizes (small, consistent with module) ----------
B = 2                                   # batch
C_TS, T = 4, 32                         # moment time-series channels / length (real: 99 x 512)
F = 3                                   # number of video frames
C_IM, H_IM, W_IM = 3, 8, 8
PATCH = 4
N_TOK = (H_IM // PATCH) * (W_IM // PATCH)   # 4 dino tokens per frame
P_DIM = C_IM * PATCH * PATCH                # 48 raw patch features
EMB_MOMENT = 256                            # real: 2048
EMB_DINO = 256                              # real: 2048
D_COMB = EMB_MOMENT + EMB_DINO              # 512
D_FUSION = 256                              # fc_fusion output dim
NUM_CLASSES = 10
LN_EPS = 1e-5
DROPOUT_RATE = 0.1                          # eval mode -> identity

# kernel-friendly padded sizes
BP = 8                                      # batch padded to a full sublane group
NC_PAD = 128                                # classes padded to a full lane group
P_PAD = 128                                 # patch features padded to a full lane group


# ----------------------------- fused kernel -----------------------------------
def _moment_dino_kernel(x1_ref, patches_ref,
                        w_me_ref, w_ml_ref, w_dino_ref,
                        g_m_ref, b_m_ref, g_d_ref, b_d_ref,
                        wf_m_ref, wf_d_ref, bf_ref,
                        g2_ref, be2_ref,
                        w_fin_ref, b_fin_ref,
                        logits_ref, fused_ref):
    f32 = jnp.float32
    bf16 = jnp.bfloat16

    # ---- MOMENT stub: linear embedding + classifier logits (MXU) ----
    x1 = x1_ref[...]                                            # [BP, C_TS*T] f32
    moment_emb = jnp.dot(x1.astype(bf16), w_me_ref[...],
                         preferred_element_type=f32)            # [BP, EMB_MOMENT]
    logits_ref[...] = jnp.dot(moment_emb.astype(bf16), w_ml_ref[...],
                              preferred_element_type=f32)       # [BP, NC_PAD] lane-dense

    # ---- DINOv2 stub: project all (frame, token) patches in one big dot ----
    patches = patches_ref[...]                                  # [F*N_TOK*BP, P_PAD] f32
    hid = jnp.dot(patches.astype(bf16), w_dino_ref[...],
                  preferred_element_type=f32)                   # [F*N_TOK*BP, EMB_DINO]

    # ---- mean over tokens (dim=1) and frames (dim=0) in one reduction ----
    # rows are grouped (frame, token)-major in sublane-aligned blocks of BP rows,
    # so the reduction is plain vreg adds (static, tile-aligned slices).
    dino_sum = hid[0:BP, :]
    for k in range(1, F * N_TOK):
        dino_sum = dino_sum + hid[k * BP:(k + 1) * BP, :]
    dino_emb = dino_sum * (1.0 / (F * N_TOK))                   # [BP, EMB_DINO]

    # ---- fusion head ----
    # dropout (eval mode -> identity)
    # LayerNorm over the virtual concat [moment_emb, dino_emb] WITHOUT materializing it:
    s = (jnp.sum(moment_emb, axis=-1, keepdims=True)
         + jnp.sum(dino_emb, axis=-1, keepdims=True))
    ss = (jnp.sum(moment_emb * moment_emb, axis=-1, keepdims=True)
          + jnp.sum(dino_emb * dino_emb, axis=-1, keepdims=True))
    mu = s * (1.0 / D_COMB)
    var = ss * (1.0 / D_COMB) - mu * mu
    rstd = lax.rsqrt(var + LN_EPS)
    hm = jnp.maximum((moment_emb - mu) * rstd * g_m_ref[...] + b_m_ref[...], 0.0)  # ReLU
    hd = jnp.maximum((dino_emb - mu) * rstd * g_d_ref[...] + b_d_ref[...], 0.0)

    # fc_fusion as two K-half dots summed (avoids concatenate)
    y = (jnp.dot(hm.astype(bf16), wf_m_ref[...], preferred_element_type=f32)
         + jnp.dot(hd.astype(bf16), wf_d_ref[...], preferred_element_type=f32)
         + bf_ref[...])                                         # [BP, D_FUSION]

    # dropout (eval mode -> identity)
    # TODO(synk): the original module applies self.norm (LayerNorm(4096)) to this
    # 256-dim tensor, which would raise in PyTorch; we normalize over D_FUSION with
    # the affine params sliced to that width.
    mu2 = jnp.mean(y, axis=-1, keepdims=True)
    var2 = jnp.mean((y - mu2) ** 2, axis=-1, keepdims=True)
    yn = (y - mu2) * lax.rsqrt(var2 + LN_EPS) * g2_ref[...] + be2_ref[...]
    yr = jnp.maximum(yn, 0.0)                                   # ReLU

    fused_ref[...] = jnp.dot(yr.astype(bf16), w_fin_ref[...],   # final_fc, lane-dense out
                             preferred_element_type=f32) + b_fin_ref[...]


def _fused_call(x1_p, patches_p, p):
    vmem = pl.BlockSpec(memory_space=pltpu.MemorySpace.VMEM)
    args = (x1_p, patches_p,
            p["w_moment_emb"], p["w_moment_logit_pad"], p["w_dino_pad"],
            p["ln_gamma_m"], p["ln_beta_m"], p["ln_gamma_d"], p["ln_beta_d"],
            p["w_fusion_m"], p["w_fusion_d"], p["b_fusion"],
            p["ln2_gamma"], p["ln2_beta"],
            p["w_final_pad"], p["b_final_pad"])
    return pl.pallas_call(
        _moment_dino_kernel,
        out_shape=(jax.ShapeDtypeStruct((BP, NC_PAD), jnp.float32),
                   jax.ShapeDtypeStruct((BP, NC_PAD), jnp.float32)),
        in_specs=[vmem] * len(args),
        out_specs=(vmem, vmem),
        compiler_params=pltpu.CompilerParams(
            vmem_limit_bytes=32 * 1024 * 1024),
    )(*args)


# ----------------------------- parameter init (deterministic) -----------------
def init_params(key):
    ks = jax.random.split(key, 8)
    # stub encoders (stand-ins for pretrained MOMENT / DINOv2)
    w_me = jax.random.normal(ks[0], (C_TS * T, EMB_MOMENT), jnp.float32) * 0.02
    w_ml = jax.random.normal(ks[1], (EMB_MOMENT, NUM_CLASSES), jnp.float32) * 0.02
    w_dino = jax.random.normal(ks[2], (P_DIM, EMB_DINO), jnp.float32) * 0.02
    # fusion head (the module's own parameters)
    gamma = jnp.ones((D_COMB,), jnp.float32)
    beta = jnp.zeros((D_COMB,), jnp.float32)
    w_fus = jax.random.normal(ks[3], (D_COMB, D_FUSION), jnp.float32) * 0.02
    b_fus = jnp.zeros((D_FUSION,), jnp.float32)
    w_fin = jax.random.normal(ks[4], (D_FUSION, NUM_CLASSES), jnp.float32) * 0.02
    b_fin = jnp.zeros((NUM_CLASSES,), jnp.float32)

    # kernel-ready forms: bf16 weights, lane-dense (128-wide) class outputs,
    # patch-feature dim padded to 128 lanes, LN affines split per embedding half.
    w_ml_pad = jnp.zeros((EMB_MOMENT, NC_PAD), jnp.float32).at[:, :NUM_CLASSES].set(w_ml)
    w_dino_pad = jnp.zeros((P_PAD, EMB_DINO), jnp.float32).at[:P_DIM, :].set(w_dino)
    w_fin_pad = jnp.zeros((D_FUSION, NC_PAD), jnp.float32).at[:, :NUM_CLASSES].set(w_fin)
    b_fin_pad = jnp.zeros((1, NC_PAD), jnp.float32).at[0, :NUM_CLASSES].set(b_fin)

    return dict(
        w_moment_emb=w_me.astype(jnp.bfloat16),
        w_moment_logit_pad=w_ml_pad.astype(jnp.bfloat16),
        w_dino_pad=w_dino_pad.astype(jnp.bfloat16),
        ln_gamma_m=gamma[:EMB_MOMENT].reshape(1, -1),
        ln_beta_m=beta[:EMB_MOMENT].reshape(1, -1),
        ln_gamma_d=gamma[EMB_MOMENT:].reshape(1, -1),
        ln_beta_d=beta[EMB_MOMENT:].reshape(1, -1),
        w_fusion_m=w_fus[:EMB_MOMENT, :].astype(jnp.bfloat16),
        w_fusion_d=w_fus[EMB_MOMENT:, :].astype(jnp.bfloat16),
        b_fusion=b_fus.reshape(1, -1),
        ln2_gamma=gamma[:D_FUSION].reshape(1, -1),
        ln2_beta=beta[:D_FUSION].reshape(1, -1),
        w_final_pad=w_fin_pad.astype(jnp.bfloat16),
        b_final_pad=b_fin_pad,
    )


# ----------------------------- forward -----------------------------------------
def moment_dino_forward(params, x1, x2):
    # TODO(synk): original forward does `x = x.permute(0, 2, 1)` on an undefined `x`;
    # we treat it as dead code and feed x1 to the MOMENT stub directly.
    Bn = x1.shape[0]

    # MOMENT stub input: flatten + pad batch to BP sublanes
    x1_flat = x1.reshape(Bn, C_TS * T)
    x1_p = jnp.zeros((BP, C_TS * T), jnp.float32).at[:Bn, :].set(x1_flat)

    # DINO stub input: patchify each frame
    #   [F, B, C, H, W] -> [F, N_TOK, B, P_DIM] -> padded [F*N_TOK*BP, P_PAD]
    patches = x2.reshape(F, Bn, C_IM, H_IM // PATCH, PATCH, W_IM // PATCH, PATCH)
    patches = patches.transpose(0, 3, 5, 1, 2, 4, 6).reshape(F, N_TOK, Bn, P_DIM)
    patches_p = (jnp.zeros((F, N_TOK, BP, P_PAD), jnp.float32)
                 .at[:, :, :Bn, :P_DIM].set(patches)
                 .reshape(F * N_TOK * BP, P_PAD))

    logits_p, fused_p = _fused_call(x1_p, patches_p, params)

    # The original forward returns output.logits (the MOMENT classifier logits),
    # not the fusion-head output; reproduce that, expose fused_out as extra.
    return logits_p[:Bn, :NUM_CLASSES], fused_p[:Bn, :NUM_CLASSES]


# ----------------------------- main ---------------------------------------------
if __name__ == "__main__":
    key = jax.random.PRNGKey(0)
    k_p, k_x1, k_x2 = jax.random.split(key, 3)
    params = init_params(k_p)

    x1 = jax.random.normal(k_x1, (B, C_TS, T), jnp.float32)
    x2 = jax.random.normal(k_x2, (F, B, C_IM, H_IM, W_IM), jnp.float32)

    logits, fused = jax.jit(moment_dino_forward)(params, x1, x2)
    jax.block_until_ready((logits, fused))

    assert logits.shape == (B, NUM_CLASSES) and fused.shape == (B, NUM_CLASSES)
    assert jnp.all(jnp.isfinite(logits)) and jnp.all(jnp.isfinite(fused))
    print("KERNEL_OK")
</pallas_src>

<mosaic_0001>
module attributes {stable_mosaic.version = 11 : i64} {
  func.func @_moment_dino_kernel(%arg0: memref<8x128xf32, #tpu.memory_space<vmem>>, %arg1: memref<96x128xf32, #tpu.memory_space<vmem>>, %arg2: memref<128x256xbf16, #tpu.memory_space<vmem>>, %arg3: memref<256x128xbf16, #tpu.memory_space<vmem>>, %arg4: memref<128x256xbf16, #tpu.memory_space<vmem>>, %arg5: memref<1x256xf32, #tpu.memory_space<vmem>>, %arg6: memref<1x256xf32, #tpu.memory_space<vmem>>, %arg7: memref<1x256xf32, #tpu.memory_space<vmem>>, %arg8: memref<1x256xf32, #tpu.memory_space<vmem>>, %arg9: memref<256x256xbf16, #tpu.memory_space<vmem>>, %arg10: memref<256x256xbf16, #tpu.memory_space<vmem>>, %arg11: memref<1x256xf32, #tpu.memory_space<vmem>>, %arg12: memref<1x256xf32, #tpu.memory_space<vmem>>, %arg13: memref<1x256xf32, #tpu.memory_space<vmem>>, %arg14: memref<256x128xbf16, #tpu.memory_space<vmem>>, %arg15: memref<1x128xf32, #tpu.memory_space<vmem>>, %arg16: memref<8x128xf32, #tpu.memory_space<vmem>>, %arg17: memref<8x128xf32, #tpu.memory_space<vmem>>) attributes {dimension_semantics = [], scalar_prefetch = 0 : i64, scratch_operands = 0 : i64, tpu.core_type = #tpu.core_type<tc>} {
    %c0 = arith.constant 0 : index
    %c0_0 = arith.constant 0 : index
    %0 = vector.load %arg0[%c0, %c0_0] : memref<8x128xf32, #tpu.memory_space<vmem>>, vector<8x128xf32>
    %1 = arith.truncf %0 : vector<8x128xf32> to vector<8x128xbf16>
    %c0_1 = arith.constant 0 : index
    %c0_2 = arith.constant 0 : index
    %2 = vector.load %arg2[%c0_1, %c0_2] : memref<128x256xbf16, #tpu.memory_space<vmem>>, vector<128x256xbf16>
    %cst = arith.constant dense<0.000000e+00> : vector<8x256xf32>
    %3 = tpu.matmul %1, %2, %cst {dimension_numbers = #tpu.dot_dimension_numbers<[1], [0], [0], [1], [0, 0, 1, 1], [], []>} : vector<8x128xbf16>, vector<128x256xbf16>, vector<8x256xf32> -> vector<8x256xf32>
    %4 = arith.truncf %3 : vector<8x256xf32> to vector<8x256xbf16>
    %c0_3 = arith.constant 0 : index
    %c0_4 = arith.constant 0 : index
    %5 = vector.load %arg3[%c0_3, %c0_4] : memref<256x128xbf16, #tpu.memory_space<vmem>>, vector<256x128xbf16>
    %cst_5 = arith.constant dense<0.000000e+00> : vector<8x128xf32>
    %6 = tpu.matmul %4, %5, %cst_5 {dimension_numbers = #tpu.dot_dimension_numbers<[1], [0], [0], [1], [0, 0, 1, 1], [], []>} : vector<8x256xbf16>, vector<256x128xbf16>, vector<8x128xf32> -> vector<8x128xf32>
    %c0_6 = arith.constant 0 : index
    %c0_7 = arith.constant 0 : index
    %7 = vector.load %arg16[%c0_6, %c0_7] : memref<8x128xf32, #tpu.memory_space<vmem>>, vector<8x128xf32>
    tpu.vector_store %arg16[%c0_6, %c0_7], %6 {strides = array<i32>} : memref<8x128xf32, #tpu.memory_space<vmem>>, vector<8x128xf32>,
    %c0_8 = arith.constant 0 : index
    %c0_9 = arith.constant 0 : index
    %8 = vector.load %arg1[%c0_8, %c0_9] : memref<96x128xf32, #tpu.memory_space<vmem>>, vector<96x128xf32>
    %9 = arith.truncf %8 : vector<96x128xf32> to vector<96x128xbf16>
    %c0_10 = arith.constant 0 : index
    %c0_11 = arith.constant 0 : index
    %10 = vector.load %arg4[%c0_10, %c0_11] : memref<128x256xbf16, #tpu.memory_space<vmem>>, vector<128x256xbf16>
    %cst_12 = arith.constant dense<0.000000e+00> : vector<96x256xf32>
    %11 = tpu.matmul %9, %10, %cst_12 {dimension_numbers = #tpu.dot_dimension_numbers<[1], [0], [0], [1], [0, 0, 1, 1], [], []>} : vector<96x128xbf16>, vector<128x256xbf16>, vector<96x256xf32> -> vector<96x256xf32>
    %12 = vector.extract_strided_slice %11 {offsets = [0, 0], sizes = [8, 256], strides = [1, 1]} : vector<96x256xf32> to vector<8x256xf32>
    %13 = vector.extract_strided_slice %11 {offsets = [8, 0], sizes = [8, 256], strides = [1, 1]} : vector<96x256xf32> to vector<8x256xf32>
    %14 = arith.addf %12, %13 : vector<8x256xf32>
    %15 = vector.extract_strided_slice %11 {offsets = [16, 0], sizes = [8, 256], strides = [1, 1]} : vector<96x256xf32> to vector<8x256xf32>
    %16 = arith.addf %14, %15 : vector<8x256xf32>
    %17 = vector.extract_strided_slice %11 {offsets = [24, 0], sizes = [8, 256], strides = [1, 1]} : vector<96x256xf32> to vector<8x256xf32>
    %18 = arith.addf %16, %17 : vector<8x256xf32>
    %19 = vector.extract_strided_slice %11 {offsets = [32, 0], sizes = [8, 256], strides = [1, 1]} : vector<96x256xf32> to vector<8x256xf32>
    %20 = arith.addf %18, %19 : vector<8x256xf32>
    %21 = vector.extract_strided_slice %11 {offsets = [40, 0], sizes = [8, 256], strides = [1, 1]} : vector<96x256xf32> to vector<8x256xf32>
    %22 = arith.addf %20, %21 : vector<8x256xf32>
    %23 = vector.extract_strided_slice %11 {offsets = [48, 0], sizes = [8, 256], strides = [1, 1]} : vector<96x256xf32> to vector<8x256xf32>
    %24 = arith.addf %22, %23 : vector<8x256xf32>
    %25 = vector.extract_strided_slice %11 {offsets = [56, 0], sizes = [8, 256], strides = [1, 1]} : vector<96x256xf32> to vector<8x256xf32>
    %26 = arith.addf %24, %25 : vector<8x256xf32>
    %27 = vector.extract_strided_slice %11 {offsets = [64, 0], sizes = [8, 256], strides = [1, 1]} : vector<96x256xf32> to vector<8x256xf32>
    %28 = arith.addf %26, %27 : vector<8x256xf32>
    %29 = vector.extract_strided_slice %11 {offsets = [72, 0], sizes = [8, 256], strides = [1, 1]} : vector<96x256xf32> to vector<8x256xf32>
    %30 = arith.addf %28, %29 : vector<8x256xf32>
    %31 = vector.extract_strided_slice %11 {offsets = [80, 0], sizes = [8, 256], strides = [1, 1]} : vector<96x256xf32> to vector<8x256xf32>
    %32 = arith.addf %30, %31 : vector<8x256xf32>
    %33 = vector.extract_strided_slice %11 {offsets = [88, 0], sizes = [8, 256], strides = [1, 1]} : vector<96x256xf32> to vector<8x256xf32>
    %34 = arith.addf %32, %33 : vector<8x256xf32>
    %cst_13 = arith.constant 0.0833333358 : f32
    %35 = vector.broadcast %cst_13 : f32 to vector<8x256xf32>
    %36 = arith.mulf %34, %35 : vector<8x256xf32>
    %cst_14 = arith.constant dense<0.000000e+00> : vector<8xf32>
    %37 = vector.multi_reduction <add>, %3, %cst_14 [1] : vector<8x256xf32> to vector<8xf32>
    %38 = vector.shape_cast %37 : vector<8xf32> to vector<8x1xf32>
    %cst_15 = arith.constant dense<0.000000e+00> : vector<8xf32>
    %39 = vector.multi_reduction <add>, %36, %cst_15 [1] : vector<8x256xf32> to vector<8xf32>
    %40 = vector.shape_cast %39 : vector<8xf32> to vector<8x1xf32>
    %41 = arith.addf %38, %40 : vector<8x1xf32>
    %42 = arith.mulf %3, %3 : vector<8x256xf32>
    %cst_16 = arith.constant dense<0.000000e+00> : vector<8xf32>
    %43 = vector.multi_reduction <add>, %42, %cst_16 [1] : vector<8x256xf32> to vector<8xf32>
    %44 = vector.shape_cast %43 : vector<8xf32> to vector<8x1xf32>
    %45 = arith.mulf %36, %36 : vector<8x256xf32>
    %cst_17 = arith.constant dense<0.000000e+00> : vector<8xf32>
    %46 = vector.multi_reduction <add>, %45, %cst_17 [1] : vector<8x256xf32> to vector<8xf32>
    %47 = vector.shape_cast %46 : vector<8xf32> to vector<8x1xf32>
    %48 = arith.addf %44, %47 : vector<8x1xf32>
    %cst_18 = arith.constant 0.001953125 : f32
    %49 = vector.broadcast %cst_18 : f32 to vector<8x1xf32>
    %50 = arith.mulf %41, %49 : vector<8x1xf32>
    %cst_19 = arith.constant 0.001953125 : f32
    %51 = vector.broadcast %cst_19 : f32 to vector<8x1xf32>
    %52 = arith.mulf %48, %51 : vector<8x1xf32>
    %53 = arith.mulf %50, %50 : vector<8x1xf32>
    %54 = arith.subf %52, %53 : vector<8x1xf32>
    %cst_20 = arith.constant 9.99999974E-6 : f32
    %55 = vector.broadcast %cst_20 : f32 to vector<8x1xf32>
    %56 = arith.addf %54, %55 : vector<8x1xf32>
    %57 = math.rsqrt %56 : vector<8x1xf32>
    %58 = vector.broadcast %50 : vector<8x1xf32> to vector<8x256xf32>
    %59 = arith.subf %3, %58 : vector<8x256xf32>
    %60 = vector.broadcast %57 : vector<8x1xf32> to vector<8x256xf32>
    %61 = arith.mulf %59, %60 : vector<8x256xf32>
    %c0_21 = arith.constant 0 : index
    %c0_22 = arith.constant 0 : index
    %62 = vector.load %arg5[%c0_21, %c0_22] : memref<1x256xf32, #tpu.memory_space<vmem>>, vector<1x256xf32>
    %63 = vector.broadcast %62 : vector<1x256xf32> to vector<8x256xf32>
    %64 = arith.mulf %61, %63 : vector<8x256xf32>
    %c0_23 = arith.constant 0 : index
    %c0_24 = arith.constant 0 : index
    %65 = vector.load %arg6[%c0_23, %c0_24] : memref<1x256xf32, #tpu.memory_space<vmem>>, vector<1x256xf32>
    %66 = vector.broadcast %65 : vector<1x256xf32> to vector<8x256xf32>
    %67 = arith.addf %64, %66 : vector<8x256xf32>
    %cst_25 = arith.constant 0.000000e+00 : f32
    %68 = vector.broadcast %cst_25 : f32 to vector<8x256xf32>
    %69 = arith.maximumf %67, %68 : vector<8x256xf32>
    %70 = vector.broadcast %50 : vector<8x1xf32> to vector<8x256xf32>
    %71 = arith.subf %36, %70 : vector<8x256xf32>
    %72 = vector.broadcast %57 : vector<8x1xf32> to vector<8x256xf32>
    %73 = arith.mulf %71, %72 : vector<8x256xf32>
    %c0_26 = arith.constant 0 : index
    %c0_27 = arith.constant 0 : index
    %74 = vector.load %arg7[%c0_26, %c0_27] : memref<1x256xf32, #tpu.memory_space<vmem>>, vector<1x256xf32>
    %75 = vector.broadcast %74 : vector<1x256xf32> to vector<8x256xf32>
    %76 = arith.mulf %73, %75 : vector<8x256xf32>
    %c0_28 = arith.constant 0 : index
    %c0_29 = arith.constant 0 : index
    %77 = vector.load %arg8[%c0_28, %c0_29] : memref<1x256xf32, #tpu.memory_space<vmem>>, vector<1x256xf32>
    %78 = vector.broadcast %77 : vector<1x256xf32> to vector<8x256xf32>
    %79 = arith.addf %76, %78 : vector<8x256xf32>
    %cst_30 = arith.constant 0.000000e+00 : f32
    %80 = vector.broadcast %cst_30 : f32 to vector<8x256xf32>
    %81 = arith.maximumf %79, %80 : vector<8x256xf32>
    %82 = arith.truncf %69 : vector<8x256xf32> to vector<8x256xbf16>
    %c0_31 = arith.constant 0 : index
    %c0_32 = arith.constant 0 : index
    %83 = vector.load %arg9[%c0_31, %c0_32] : memref<256x256xbf16, #tpu.memory_space<vmem>>, vector<256x256xbf16>
    %cst_33 = arith.constant dense<0.000000e+00> : vector<8x256xf32>
    %84 = tpu.matmul %82, %83, %cst_33 {dimension_numbers = #tpu.dot_dimension_numbers<[1], [0], [0], [1], [0, 0, 1, 1], [], []>} : vector<8x256xbf16>, vector<256x256xbf16>, vector<8x256xf32> -> vector<8x256xf32>
    %85 = arith.truncf %81 : vector<8x256xf32> to vector<8x256xbf16>
    %c0_34 = arith.constant 0 : index
    %c0_35 = arith.constant 0 : index
    %86 = vector.load %arg10[%c0_34, %c0_35] : memref<256x256xbf16, #tpu.memory_space<vmem>>, vector<256x256xbf16>
    %cst_36 = arith.constant dense<0.000000e+00> : vector<8x256xf32>
    %87 = tpu.matmul %85, %86, %cst_36 {dimension_numbers = #tpu.dot_dimension_numbers<[1], [0], [0], [1], [0, 0, 1, 1], [], []>} : vector<8x256xbf16>, vector<256x256xbf16>, vector<8x256xf32> -> vector<8x256xf32>
    %88 = arith.addf %84, %87 : vector<8x256xf32>
    %c0_37 = arith.constant 0 : index
    %c0_38 = arith.constant 0 : index
    %89 = vector.load %arg11[%c0_37, %c0_38] : memref<1x256xf32, #tpu.memory_space<vmem>>, vector<1x256xf32>
    %90 = vector.broadcast %89 : vector<1x256xf32> to vector<8x256xf32>
    %91 = arith.addf %88, %90 : vector<8x256xf32>
    %cst_39 = arith.constant dense<0.000000e+00> : vector<8xf32>
    %92 = vector.multi_reduction <add>, %91, %cst_39 [1] : vector<8x256xf32> to vector<8xf32>
    %93 = vector.shape_cast %92 : vector<8xf32> to vector<8x1xf32>
    %cst_40 = arith.constant 2.560000e+02 : f32
    %94 = vector.broadcast %cst_40 : f32 to vector<8x1xf32>
    %95 = arith.divf %93, %94 : vector<8x1xf32>
    %96 = vector.broadcast %95 : vector<8x1xf32> to vector<8x256xf32>
    %97 = arith.subf %91, %96 : vector<8x256xf32>
    %98 = arith.mulf %97, %97 : vector<8x256xf32>
    %cst_41 = arith.constant dense<0.000000e+00> : vector<8xf32>
    %99 = vector.multi_reduction <add>, %98, %cst_41 [1] : vector<8x256xf32> to vector<8xf32>
    %100 = vector.shape_cast %99 : vector<8xf32> to vector<8x1xf32>
    %cst_42 = arith.constant 2.560000e+02 : f32
    %101 = vector.broadcast %cst_42 : f32 to vector<8x1xf32>
    %102 = arith.divf %100, %101 : vector<8x1xf32>
    %103 = vector.broadcast %95 : vector<8x1xf32> to vector<8x256xf32>
    %104 = arith.subf %91, %103 : vector<8x256xf32>
    %cst_43 = arith.constant 9.99999974E-6 : f32
    %105 = vector.broadcast %cst_43 : f32 to vector<8x1xf32>
    %106 = arith.addf %102, %105 : vector<8x1xf32>
    %107 = math.rsqrt %106 : vector<8x1xf32>
    %108 = vector.broadcast %107 : vector<8x1xf32> to vector<8x256xf32>
    %109 = arith.mulf %104, %108 : vector<8x256xf32>
    %c0_44 = arith.constant 0 : index
    %c0_45 = arith.constant 0 : index
    %110 = vector.load %arg12[%c0_44, %c0_45] : memref<1x256xf32, #tpu.memory_space<vmem>>, vector<1x256xf32>
    %111 = vector.broadcast %110 : vector<1x256xf32> to vector<8x256xf32>
    %112 = arith.mulf %109, %111 : vector<8x256xf32>
    %c0_46 = arith.constant 0 : index
    %c0_47 = arith.constant 0 : index
    %113 = vector.load %arg13[%c0_46, %c0_47] : memref<1x256xf32, #tpu.memory_space<vmem>>, vector<1x256xf32>
    %114 = vector.broadcast %113 : vector<1x256xf32> to vector<8x256xf32>
    %115 = arith.addf %112, %114 : vector<8x256xf32>
    %cst_48 = arith.constant 0.000000e+00 : f32
    %116 = vector.broadcast %cst_48 : f32 to vector<8x256xf32>
    %117 = arith.maximumf %115, %116 : vector<8x256xf32>
    %118 = arith.truncf %117 : vector<8x256xf32> to vector<8x256xbf16>
    %c0_49 = arith.constant 0 : index
    %c0_50 = arith.constant 0 : index
    %119 = vector.load %arg14[%c0_49, %c0_50] : memref<256x128xbf16, #tpu.memory_space<vmem>>, vector<256x128xbf16>
    %cst_51 = arith.constant dense<0.000000e+00> : vector<8x128xf32>
    %120 = tpu.matmul %118, %119, %cst_51 {dimension_numbers = #tpu.dot_dimension_numbers<[1], [0], [0], [1], [0, 0, 1, 1], [], []>} : vector<8x256xbf16>, vector<256x128xbf16>, vector<8x128xf32> -> vector<8x128xf32>
    %c0_52 = arith.constant 0 : index
    %c0_53 = arith.constant 0 : index
    %121 = vector.load %arg15[%c0_52, %c0_53] : memref<1x128xf32, #tpu.memory_space<vmem>>, vector<1x128xf32>
    %122 = vector.broadcast %121 : vector<1x128xf32> to vector<8x128xf32>
    %123 = arith.addf %120, %122 : vector<8x128xf32>
    %c0_54 = arith.constant 0 : index
    %c0_55 = arith.constant 0 : index
    %124 = vector.load %arg17[%c0_54, %c0_55] : memref<8x128xf32, #tpu.memory_space<vmem>>, vector<8x128xf32>
    tpu.vector_store %arg17[%c0_54, %c0_55], %123 {strides = array<i32>} : memref<8x128xf32, #tpu.memory_space<vmem>>, vector<8x128xf32>,
    return
  }
}

</mosaic_0001>

<llo_original>
// kernel: moment_dino_forward.1
$region0: #{moment_dino_forward.1}
  #allocation0 [shape = 'u32[]', space=smem, size = 0x4, offset = 0x4, fixed_abs, tag = 'smem constant byte address 0x4 - core index']
  #allocation1 [shape = 'u32[144,128]{1,0:T(1,128)}', space=vmem, size = 0x12000, scoped, tag = 'internal scratch']
  %s0 = inlined_call_operand.vmem [shape: f32[8,128], index: 0, kind: input, shape index: {}]
  %s1 = inlined_call_operand.vmem [shape: f32[96,128], index: 1, kind: input, shape index: {}]
  %s2 = inlined_call_operand.vmem [shape: bf16[128,256], index: 2, kind: input, shape index: {}]
  %s3 = inlined_call_operand.vmem [shape: bf16[256,128], index: 3, kind: input, shape index: {}]
  %s4 = inlined_call_operand.vmem [shape: bf16[128,256], index: 4, kind: input, shape index: {}]
  %s5 = inlined_call_operand.vmem [shape: f32[1,256], index: 5, kind: input, shape index: {}]
  %s6 = inlined_call_operand.vmem [shape: f32[1,256], index: 6, kind: input, shape index: {}]
  %s7 = inlined_call_operand.vmem [shape: f32[1,256], index: 7, kind: input, shape index: {}]
  %s8 = inlined_call_operand.vmem [shape: f32[1,256], index: 8, kind: input, shape index: {}]
  %s9 = inlined_call_operand.vmem [shape: bf16[256,256], index: 9, kind: input, shape index: {}]
  %s10 = inlined_call_operand.vmem [shape: bf16[256,256], index: 10, kind: input, shape index: {}]
  %s11 = inlined_call_operand.vmem [shape: f32[1,256], index: 11, kind: input, shape index: {}]
  %s12 = inlined_call_operand.vmem [shape: f32[1,256], index: 12, kind: input, shape index: {}]
  %s13 = inlined_call_operand.vmem [shape: f32[1,256], index: 13, kind: input, shape index: {}]
  %s14 = inlined_call_operand.vmem [shape: bf16[256,128], index: 14, kind: input, shape index: {}]
  %s15 = inlined_call_operand.vmem [shape: f32[1,128], index: 15, kind: input, shape index: {}]
  %s16 = inlined_call_operand.vmem [shape: f32[8,128], index: 16, kind: output, shape index: {0}]
  %s17 = inlined_call_operand.vmem [shape: f32[8,128], index: 17, kind: output, shape index: {1}]
  %18 = xla_tuple %s16, %s17
  %s19 = sld [smem:[#allocation0]]
  $region82: #{moment_dino_forward.1} parent=0
    _
  %s21 = ssub.s32 1, %s19
  %s22 = scalar_select 0, %s21, %s19
  // Predicated region
  $region2: #{moment_dino_forward.1} parent=0 // pred_check
    _
  $region3: #{moment_dino_forward.1} parent=0 // pred_check_branch
    %24 = sbr.rel (0) target = $region5
  $region4: #{moment_dino_forward.1} parent=0 // pred_region
    _
  $region5: #{moment_dino_forward.1} parent=0 // pred_fallthru
    _
  // Predicated region
  $region6: #{moment_dino_forward.1} parent=0 // pred_check
    _
  $region7: #{moment_dino_forward.1} parent=0 // pred_check_branch
    %26 = sbr.rel (0) target = $region9
  $region8: #{moment_dino_forward.1} parent=0 // pred_region
    _
  $region9: #{moment_dino_forward.1} parent=0 // pred_fallthru
    _
  // Predicated region
  $region10: #{moment_dino_forward.1} parent=0 // pred_check
    _
  $region11: #{moment_dino_forward.1} parent=0 // pred_check_branch
    %28 = sbr.rel (0) target = $region13
  $region12: #{moment_dino_forward.1} parent=0 // pred_region
    _
  $region13: #{moment_dino_forward.1} parent=0 // pred_fallthru
    _
  // Predicated region
  $region14: #{moment_dino_forward.1} parent=0 // pred_check
    _
  $region15: #{moment_dino_forward.1} parent=0 // pred_check_branch
    %30 = sbr.rel (0) target = $region17
  $region16: #{moment_dino_forward.1} parent=0 // pred_region
    _
  $region17: #{moment_dino_forward.1} parent=0 // pred_fallthru
    _
  // Predicated region
  $region18: #{moment_dino_forward.1} parent=0 // pred_check
    _
  $region19: #{moment_dino_forward.1} parent=0 // pred_check_branch
    %32 = sbr.rel (0) target = $region21
  $region20: #{moment_dino_forward.1} parent=0 // pred_region
    _
  $region21: #{moment_dino_forward.1} parent=0 // pred_fallthru
    _
  // Predicated region
  $region22: #{moment_dino_forward.1} parent=0 // pred_check
    _
  $region23: #{moment_dino_forward.1} parent=0 // pred_check_branch
    %34 = sbr.rel (0) target = $region25
  $region24: #{moment_dino_forward.1} parent=0 // pred_region
    _
  $region25: #{moment_dino_forward.1} parent=0 // pred_fallthru
    _
  // Predicated region
  $region26: #{moment_dino_forward.1} parent=0 // pred_check
    _
  $region27: #{moment_dino_forward.1} parent=0 // pred_check_branch
    %36 = sbr.rel (0) target = $region29
  $region28: #{moment_dino_forward.1} parent=0 // pred_region
    _
  $region29: #{moment_dino_forward.1} parent=0 // pred_fallthru
    _
  // Predicated region
  $region30: #{moment_dino_forward.1} parent=0 // pred_check
    _
  $region31: #{moment_dino_forward.1} parent=0 // pred_check_branch
    %38 = sbr.rel (0) target = $region33
  $region32: #{moment_dino_forward.1} parent=0 // pred_region
    _
  $region33: #{moment_dino_forward.1} parent=0 // pred_fallthru
    _
  // Predicated region
  $region34: #{moment_dino_forward.1} parent=0 // pred_check
    _
  $region35: #{moment_dino_forward.1} parent=0 // pred_check_branch
    %40 = sbr.rel (0) target = $region37
  $region36: #{moment_dino_forward.1} parent=0 // pred_region
    _
  $region37: #{moment_dino_forward.1} parent=0 // pred_fallthru
    _
  // Predicated region
  $region38: #{moment_dino_forward.1} parent=0 // pred_check
    _
  $region39: #{moment_dino_forward.1} parent=0 // pred_check_branch
    %42 = sbr.rel (0) target = $region41
  $region40: #{moment_dino_forward.1} parent=0 // pred_region
    _
  $region41: #{moment_dino_forward.1} parent=0 // pred_fallthru
    _
  // Predicated region
  $region42: #{moment_dino_forward.1} parent=0 // pred_check
    _
  $region43: #{moment_dino_forward.1} parent=0 // pred_check_branch
    %44 = sbr.rel (0) target = $region45
  $region44: #{moment_dino_forward.1} parent=0 // pred_region
    _
  $region45: #{moment_dino_forward.1} parent=0 // pred_fallthru
    _
  // Predicated region
  $region46: #{moment_dino_forward.1} parent=0 // pred_check
    _
  $region47: #{moment_dino_forward.1} parent=0 // pred_check_branch
    %46 = sbr.rel (0) target = $region49
  $region48: #{moment_dino_forward.1} parent=0 // pred_region
    _
  $region49: #{moment_dino_forward.1} parent=0 // pred_fallthru
    _
  // Predicated region
  $region50: #{moment_dino_forward.1} parent=0 // pred_check
    _
  $region51: #{moment_dino_forward.1} parent=0 // pred_check_branch
    %48 = sbr.rel (0) target = $region53
  $region52: #{moment_dino_forward.1} parent=0 // pred_region
    _
  $region53: #{moment_dino_forward.1} parent=0 // pred_fallthru
    _
  // Predicated region
  $region54: #{moment_dino_forward.1} parent=0 // pred_check
    _
  $region55: #{moment_dino_forward.1} parent=0 // pred_check_branch
    %50 = sbr.rel (0) target = $region57
  $region56: #{moment_dino_forward.1} parent=0 // pred_region
    _
  $region57: #{moment_dino_forward.1} parent=0 // pred_fallthru
    _
  // Predicated region
  $region58: #{moment_dino_forward.1} parent=0 // pred_check
    _
  $region59: #{moment_dino_forward.1} parent=0 // pred_check_branch
    %52 = sbr.rel (0) target = $region61
  $region60: #{moment_dino_forward.1} parent=0 // pred_region
    _
  $region61: #{moment_dino_forward.1} parent=0 // pred_fallthru
    _
  // Predicated region
  $region62: #{moment_dino_forward.1} parent=0 // pred_check
    _
  $region63: #{moment_dino_forward.1} parent=0 // pred_check_branch
    %54 = sbr.rel (0) target = $region65
  $region64: #{moment_dino_forward.1} parent=0 // pred_region
    _
  $region65: #{moment_dino_forward.1} parent=0 // pred_fallthru
    _
  %v56 = vld [vmem:[%s0] sm:$0xff]
  %v57 = vpack.c.bf16 %v56, %v56
  %v58 = vld [vmem:[%s2] sm:$0xff]
  %v59 = vld [vmem:[%s2 + $0x8] sm:$0xff]
  %v60 = vld [vmem:[%s2 + $0x10] sm:$0xff]
  %v61 = vld [vmem:[%s2 + $0x18] sm:$0xff]
  %v62 = vld [vmem:[%s2 + $0x20] sm:$0xff]
  %v63 = vld [vmem:[%s2 + $0x28] sm:$0xff]
  %v64 = vld [vmem:[%s2 + $0x30] sm:$0xff]
  %v65 = vld [vmem:[%s2 + $0x38] sm:$0xff]
  %v66 = vld [vmem:[%s2 + $0x40] sm:$0xff]
  %v67 = vld [vmem:[%s2 + $0x48] sm:$0xff]
  %v68 = vld [vmem:[%s2 + $0x50] sm:$0xff]
  %v69 = vld [vmem:[%s2 + $0x58] sm:$0xff]
  %v70 = vld [vmem:[%s2 + $0x60] sm:$0xff]
  %v71 = vld [vmem:[%s2 + $0x68] sm:$0xff]
  %v72 = vld [vmem:[%s2 + $0x70] sm:$0xff]
  %v73 = vld [vmem:[%s2 + $0x78] sm:$0xff]
  %v90 = vunpack.c.l.b16 %v58
  %v91 = vunpack.c.h.b16 %v58
  %v92 = vunpack.c.l.b16 %v59
  %v93 = vunpack.c.h.b16 %v59
  %v94 = vunpack.c.l.b16 %v60
  %v95 = vunpack.c.h.b16 %v60
  %v96 = vunpack.c.l.b16 %v61
  %v97 = vunpack.c.h.b16 %v61
  %v98 = vunpack.c.l.b16 %v62
  %v99 = vunpack.c.h.b16 %v62
  %v100 = vunpack.c.l.b16 %v63
  %v101 = vunpack.c.h.b16 %v63
  %v102 = vunpack.c.l.b16 %v64
  %v103 = vunpack.c.h.b16 %v64
  %v104 = vunpack.c.l.b16 %v65
  %v105 = vunpack.c.h.b16 %v65
  %v106 = vunpack.c.l.b16 %v66
  %v107 = vunpack.c.h.b16 %v66
  %v108 = vunpack.c.l.b16 %v67
  %v109 = vunpack.c.h.b16 %v67
  %v110 = vunpack.c.l.b16 %v68
  %v111 = vunpack.c.h.b16 %v68
  %v112 = vunpack.c.l.b16 %v69
  %v113 = vunpack.c.h.b16 %v69
  %v114 = vunpack.c.l.b16 %v70
  %v115 = vunpack.c.h.b16 %v70
  %v116 = vunpack.c.l.b16 %v71
  %v117 = vunpack.c.h.b16 %v71
  %v118 = vunpack.c.l.b16 %v72
  %v119 = vunpack.c.h.b16 %v72
  %v120 = vunpack.c.l.b16 %v73
  %v121 = vunpack.c.h.b16 %v73
  %v122 = vpack.c.b16 %v92, %v90
  %v123 = vpack.c.b16 %v93, %v91
  %v124 = vpack.c.b16 %v96, %v94
  %v125 = vpack.c.b16 %v97, %v95
  %v126 = vpack.c.b16 %v100, %v98
  %v127 = vpack.c.b16 %v101, %v99
  %v128 = vpack.c.b16 %v104, %v102
  %v129 = vpack.c.b16 %v105, %v103
  %v130 = vpack.c.b16 %v108, %v106
  %v131 = vpack.c.b16 %v109, %v107
  %v132 = vpack.c.b16 %v112, %v110
  %v133 = vpack.c.b16 %v113, %v111
  %v134 = vpack.c.b16 %v116, %v114
  %v135 = vpack.c.b16 %v117, %v115
  %v136 = vpack.c.b16 %v120, %v118
  %v137 = vpack.c.b16 %v121, %v119
  %154 = vmatprep.subr.bf16.mxu0 %v123
  %155 = vmatpush1.bf16.msra.mxu0 %v122
  %156 = vmatprep.subr.bf16.mxu0 %v125
  %157 = vmatpush1.bf16.msra.mxu0 %v124
  %158 = vmatprep.subr.bf16.mxu0 %v127
  %159 = vmatpush1.bf16.msra.mxu0 %v126
  %160 = vmatprep.subr.bf16.mxu0 %v129
  %161 = vmatpush1.bf16.msra.mxu0 %v128
  %162 = vmatprep.subr.bf16.mxu0 %v131
  %163 = vmatpush1.bf16.msra.mxu0 %v130
  %164 = vmatprep.subr.bf16.mxu0 %v133
  %165 = vmatpush1.bf16.msra.mxu0 %v132
  %166 = vmatprep.subr.bf16.mxu0 %v135
  %167 = vmatpush1.bf16.msra.mxu0 %v134
  %168 = vmatprep.subr.bf16.mxu0 %v137
  %169 = vmatpush1.bf16.msra.mxu0 %v136
  %170 = vmatprep.subr.bf16.mxu0 0
  %171 = vmatpush1.bf16.msra.mxu0 0
  %172 = vmatprep.subr.bf16.mxu0 0
  %173 = vmatpush1.bf16.msra.mxu0 0
  %174 = vmatprep.subr.bf16.mxu0 0
  %175 = vmatpush1.bf16.msra.mxu0 0
  %176 = vmatprep.subr.bf16.mxu0 0
  %177 = vmatpush1.bf16.msra.mxu0 0
  %178 = vmatprep.subr.bf16.mxu0 0
  %179 = vmatpush1.bf16.msra.mxu0 0
  %180 = vmatprep.subr.bf16.mxu0 0
  %181 = vmatpush1.bf16.msra.mxu0 0
  %182 = vmatprep.subr.bf16.mxu0 0
  %183 = vmatpush1.bf16.msra.mxu0 0
  %184 = vmatprep.subr.bf16.mxu0 0
  %185 = vmatpush1.bf16.msra.mxu0 0
  %186 = vmatprep.mubr.bf16.mxu0 0
  %187 = vmatmul.mubr.bf16.gmra.mrb[0].mxu0 %v57
  %v188 = vpop.f32.mrb[0].mxu0
  %v189 = vadd.f32 0.0, %v188
  %v190 = vpop.f32.mrb[0].mxu0
  %v191 = vadd.f32 0.0, %v190
  %v192 = vpop.f32.mrb[0].mxu0
  %v193 = vpop.f32.mrb[0].mxu0
  %194 = vdwg.mxu0
  %v195 = vpack.c.bf16 %v189, %v189
  %v196 = vpack.c.bf16 %v191, %v191
  %v197 = vld [vmem:[%s3] sm:$0xf]
  %v198 = vld [vmem:[%s3 + $0x4] sm:$0xf]
  %v199 = vld [vmem:[%s3 + $0x8] sm:$0xf]
  %v200 = vld [vmem:[%s3 + $0xc] sm:$0xf]
  %v201 = vld [vmem:[%s3 + $0x10] sm:$0xf]
  %v202 = vld [vmem:[%s3 + $0x14] sm:$0xf]
  %v203 = vld [vmem:[%s3 + $0x18] sm:$0xf]
  %v204 = vld [vmem:[%s3 + $0x1c] sm:$0xf]
  %v205 = vld [vmem:[%s3 + $0x20] sm:$0xf]
  %v206 = vld [vmem:[%s3 + $0x24] sm:$0xf]
  %v207 = vld [vmem:[%s3 + $0x28] sm:$0xf]
  %v208 = vld [vmem:[%s3 + $0x2c] sm:$0xf]
  %v209 = vld [vmem:[%s3 + $0x30] sm:$0xf]
  %v210 = vld [vmem:[%s3 + $0x34] sm:$0xf]
  %v211 = vld [vmem:[%s3 + $0x38] sm:$0xf]
  %v212 = vld [vmem:[%s3 + $0x3c] sm:$0xf]
  %v213 = vld [vmem:[%s3 + $0x40] sm:$0xf]
  %v214 = vld [vmem:[%s3 + $0x44] sm:$0xf]
  %v215 = vld [vmem:[%s3 + $0x48] sm:$0xf]
  %v216 = vld [vmem:[%s3 + $0x4c] sm:$0xf]
  %v217 = vld [vmem:[%s3 + $0x50] sm:$0xf]
  %v218 = vld [vmem:[%s3 + $0x54] sm:$0xf]
  %v219 = vld [vmem:[%s3 + $0x58] sm:$0xf]
  %v220 = vld [vmem:[%s3 + $0x5c] sm:$0xf]
  %v221 = vld [vmem:[%s3 + $0x60] sm:$0xf]
  %v222 = vld [vmem:[%s3 + $0x64] sm:$0xf]
  %v223 = vld [vmem:[%s3 + $0x68] sm:$0xf]
  %v224 = vld [vmem:[%s3 + $0x6c] sm:$0xf]
  %v225 = vld [vmem:[%s3 + $0x70] sm:$0xf]
  %v226 = vld [vmem:[%s3 + $0x74] sm:$0xf]
  %v227 = vld [vmem:[%s3 + $0x78] sm:$0xf]
  %v228 = vld [vmem:[%s3 + $0x7c] sm:$0xf]
  %v261 = vunpack.c.l.b16 %v197
  %v262 = vunpack.c.l.b16 %v198
  %v263 = vunpack.c.l.b16 %v199
  %v264 = vunpack.c.l.b16 %v200
  %v265 = vunpack.c.l.b16 %v201
  %v266 = vunpack.c.l.b16 %v202
  %v267 = vunpack.c.l.b16 %v203
  %v268 = vunpack.c.l.b16 %v204
  %v269 = vunpack.c.l.b16 %v205
  %v270 = vunpack.c.l.b16 %v206
  %v271 = vunpack.c.l.b16 %v207
  %v272 = vunpack.c.l.b16 %v208
  %v273 = vunpack.c.l.b16 %v209
  %v274 = vunpack.c.l.b16 %v210
  %v275 = vunpack.c.l.b16 %v211
  %v276 = vunpack.c.l.b16 %v212
  %v277 = vunpack.c.l.b16 %v213
  %v278 = vunpack.c.l.b16 %v214
  %v279 = vunpack.c.l.b16 %v215
  %v280 = vunpack.c.l.b16 %v216
  %v281 = vunpack.c.l.b16 %v217
  %v282 = vunpack.c.l.b16 %v218
  %v283 = vunpack.c.l.b16 %v219
  %v284 = vunpack.c.l.b16 %v220
  %v285 = vunpack.c.l.b16 %v221
  %v286 = vunpack.c.l.b16 %v222
  %v287 = vunpack.c.l.b16 %v223
  %v288 = vunpack.c.l.b16 %v224
  %v289 = vunpack.c.l.b16 %v225
  %v290 = vunpack.c.l.b16 %v226
  %v291 = vunpack.c.l.b16 %v227
  %v292 = vunpack.c.l.b16 %v228
  %v293 = vpack.c.b16 %v262, %v261
  %v294 = vpack.c.b16 %v264, %v263
  %v295 = vpack.c.b16 %v266, %v265
  %v296 = vpack.c.b16 %v268, %v267
  %v297 = vpack.c.b16 %v270, %v269
  %v298 = vpack.c.b16 %v272, %v271
  %v299 = vpack.c.b16 %v274, %v273
  %v300 = vpack.c.b16 %v276, %v275
  %v301 = vpack.c.b16 %v278, %v277
  %v302 = vpack.c.b16 %v280, %v279
  %v303 = vpack.c.b16 %v282, %v281
  %v304 = vpack.c.b16 %v284, %v283
  %v305 = vpack.c.b16 %v286, %v285
  %v306 = vpack.c.b16 %v288, %v287
  %v307 = vpack.c.b16 %v290, %v289
  %v308 = vpack.c.b16 %v292, %v291
  %325 = vmatprep.subr.bf16.mxu0 0
  %326 = vmatpush1.bf16.msra.mxu0 %v293
  %327 = vmatprep.subr.bf16.mxu0 0
  %328 = vmatpush1.bf16.msra.mxu0 %v294
  %329 = vmatprep.subr.bf16.mxu0 0
  %330 = vmatpush1.bf16.msra.mxu0 %v295
  %331 = vmatprep.subr.bf16.mxu0 0
  %332 = vmatpush1.bf16.msra.mxu0 %v296
  %333 = vmatprep.subr.bf16.mxu0 0
  %334 = vmatpush1.bf16.msra.mxu0 %v297
  %335 = vmatprep.subr.bf16.mxu0 0
  %336 = vmatpush1.bf16.msra.mxu0 %v298
  %337 = vmatprep.subr.bf16.mxu0 0
  %338 = vmatpush1.bf16.msra.mxu0 %v299
  %339 = vmatprep.subr.bf16.mxu0 0
  %340 = vmatpush1.bf16.msra.mxu0 %v300
  %341 = vmatprep.subr.bf16.mxu0 0
  %342 = vmatpush1.bf16.msra.mxu0 %v301
  %343 = vmatprep.subr.bf16.mxu0 0
  %344 = vmatpush1.bf16.msra.mxu0 %v302
  %345 = vmatprep.subr.bf16.mxu0 0
  %346 = vmatpush1.bf16.msra.mxu0 %v303
  %347 = vmatprep.subr.bf16.mxu0 0
  %348 = vmatpush1.bf16.msra.mxu0 %v304
  %349 = vmatprep.subr.bf16.mxu0 0
  %350 = vmatpush1.bf16.msra.mxu0 %v305
  %351 = vmatprep.subr.bf16.mxu0 0
  %352 = vmatpush1.bf16.msra.mxu0 %v306
  %353 = vmatprep.subr.bf16.mxu0 0
  %354 = vmatpush1.bf16.msra.mxu0 %v307
  %355 = vmatprep.subr.bf16.mxu0 0
  %356 = vmatpush1.bf16.msra.mxu0 %v308
  %357 = vmatprep.mubr.bf16.mxu0 %v196
  %358 = vmatmul.mubr.bf16.gmra.mrb[0].mxu0 %v195
  %v359 = vpop.f32.mrb[0].mxu0
  %v360 = vadd.f32 0.0, %v359
  %v361 = vpop.f32.mrb[0].mxu0
  %v362 = vpop.f32.mrb[0].mxu0
  %v363 = vpop.f32.mrb[0].mxu0
  %364 = vdwg.mxu0
  %365 = vst [vmem:[%s16] sm:$0xff] %v360
  %v366 = vld [vmem:[%s1] sm:$0xff]
  %v367 = vld [vmem:[%s1 + $0x8] sm:$0xff]
  %v368 = vld [vmem:[%s1 + $0x10] sm:$0xff]
  %v369 = vld [vmem:[%s1 + $0x18] sm:$0xff]
  %v370 = vld [vmem:[%s1 + $0x20] sm:$0xff]
  %v371 = vld [vmem:[%s1 + $0x28] sm:$0xff]
  %v372 = vld [vmem:[%s1 + $0x30] sm:$0xff]
  %v373 = vld [vmem:[%s1 + $0x38] sm:$0xff]
  %v374 = vld [vmem:[%s1 + $0x40] sm:$0xff]
  %v375 = vld [vmem:[%s1 + $0x48] sm:$0xff]
  %v376 = vld [vmem:[%s1 + $0x50] sm:$0xff]
  %v377 = vld [vmem:[%s1 + $0x58] sm:$0xff]
  %v378 = vpack.c.bf16 %v367, %v366
  %v379 = vpack.c.bf16 %v369, %v368
  %v380 = vpack.c.bf16 %v371, %v370
  %v381 = vpack.c.bf16 %v373, %v372
  %v382 = vpack.c.bf16 %v375, %v374
  %v383 = vpack.c.bf16 %v377, %v376
  %v384 = vld [vmem:[%s4] sm:$0xff]
  %v385 = vld [vmem:[%s4 + $0x8] sm:$0xff]
  %v386 = vld [vmem:[%s4 + $0x10] sm:$0xff]
  %v387 = vld [vmem:[%s4 + $0x18] sm:$0xff]
  %v388 = vld [vmem:[%s4 + $0x20] sm:$0xff]
  %v389 = vld [vmem:[%s4 + $0x28] sm:$0xff]
  %v390 = vld [vmem:[%s4 + $0x30] sm:$0xff]
  %v391 = vld [vmem:[%s4 + $0x38] sm:$0xff]
  %v392 = vld [vmem:[%s4 + $0x40] sm:$0xff]
  %v393 = vld [vmem:[%s4 + $0x48] sm:$0xff]
  %v394 = vld [vmem:[%s4 + $0x50] sm:$0xff]
  %v395 = vld [vmem:[%s4 + $0x58] sm:$0xff]
  %v396 = vld [vmem:[%s4 + $0x60] sm:$0xff]
  %v397 = vld [vmem:[%s4 + $0x68] sm:$0xff]
  %v398 = vld [vmem:[%s4 + $0x70] sm:$0xff]
  %v399 = vld [vmem:[%s4 + $0x78] sm:$0xff]
  %v416 = vunpack.c.l.b16 %v384
  %v417 = vunpack.c.h.b16 %v384
  %v418 = vunpack.c.l.b16 %v385
  %v419 = vunpack.c.h.b16 %v385
  %v420 = vunpack.c.l.b16 %v386
  %v421 = vunpack.c.h.b16 %v386
  %v422 = vunpack.c.l.b16 %v387
  %v423 = vunpack.c.h.b16 %v387
  %v424 = vunpack.c.l.b16 %v388
  %v425 = vunpack.c.h.b16 %v388
  %v426 = vunpack.c.l.b16 %v389
  %v427 = vunpack.c.h.b16 %v389
  %v428 = vunpack.c.l.b16 %v390
  %v429 = vunpack.c.h.b16 %v390
  %v430 = vunpack.c.l.b16 %v391
  %v431 = vunpack.c.h.b16 %v391
  %v432 = vunpack.c.l.b16 %v392
  %v433 = vunpack.c.h.b16 %v392
  %v434 = vunpack.c.l.b16 %v393
  %v435 = vunpack.c.h.b16 %v393
  %v436 = vunpack.c.l.b16 %v394
  %v437 = vunpack.c.h.b16 %v394
  %v438 = vunpack.c.l.b16 %v395
  %v439 = vunpack.c.h.b16 %v395
  %v440 = vunpack.c.l.b16 %v396
  %v441 = vunpack.c.h.b16 %v396
  %v442 = vunpack.c.l.b16 %v397
  %v443 = vunpack.c.h.b16 %v397
  %v444 = vunpack.c.l.b16 %v398
  %v445 = vunpack.c.h.b16 %v398
  %v446 = vunpack.c.l.b16 %v399
  %v447 = vunpack.c.h.b16 %v399
  %v448 = vpack.c.b16 %v418, %v416
  %v449 = vpack.c.b16 %v419, %v417
  %v450 = vpack.c.b16 %v422, %v420
  %v451 = vpack.c.b16 %v423, %v421
  %v452 = vpack.c.b16 %v426, %v424
  %v453 = vpack.c.b16 %v427, %v425
  %v454 = vpack.c.b16 %v430, %v428
  %v455 = vpack.c.b16 %v431, %v429
  %v456 = vpack.c.b16 %v434, %v432
  %v457 = vpack.c.b16 %v435, %v433
  %v458 = vpack.c.b16 %v438, %v436
  %v459 = vpack.c.b16 %v439, %v437
  %v460 = vpack.c.b16 %v442, %v440
  %v461 = vpack.c.b16 %v443, %v441
  %v462 = vpack.c.b16 %v446, %v444
  %v463 = vpack.c.b16 %v447, %v445
  %480 = vmatprep.subr.bf16.mxu0 %v449
  %481 = vmatpush1.bf16.msra.mxu0 %v448
  %482 = vmatprep.subr.bf16.mxu0 %v451
  %483 = vmatpush1.bf16.msra.mxu0 %v450
  %484 = vmatprep.subr.bf16.mxu0 %v453
  %485 = vmatpush1.bf16.msra.mxu0 %v452
  %486 = vmatprep.subr.bf16.mxu0 %v455
  %487 = vmatpush1.bf16.msra.mxu0 %v454
  %488 = vmatprep.subr.bf16.mxu0 %v457
  %489 = vmatpush1.bf16.msra.mxu0 %v456
  %490 = vmatprep.subr.bf16.mxu0 %v459
  %491 = vmatpush1.bf16.msra.mxu0 %v458
  %492 = vmatprep.subr.bf16.mxu0 %v461
  %493 = vmatpush1.bf16.msra.mxu0 %v460
  %494 = vmatprep.subr.bf16.mxu0 %v463
  %495 = vmatpush1.bf16.msra.mxu0 %v462
  %496 = vmatprep.subr.bf16.mxu0 0
  %497 = vmatpush1.bf16.msra.mxu0 0
  %498 = vmatprep.subr.bf16.mxu0 0
  %499 = vmatpush1.bf16.msra.mxu0 0
  %500 = vmatprep.subr.bf16.mxu0 0
  %501 = vmatpush1.bf16.msra.mxu0 0
  %502 = vmatprep.subr.bf16.mxu0 0
  %503 = vmatpush1.bf16.msra.mxu0 0
  %504 = vmatprep.subr.bf16.mxu0 0
  %505 = vmatpush1.bf16.msra.mxu0 0
  %506 = vmatprep.subr.bf16.mxu0 0
  %507 = vmatpush1.bf16.msra.mxu0 0
  %508 = vmatprep.subr.bf16.mxu0 0
  %509 = vmatpush1.bf16.msra.mxu0 0
  %510 = vmatprep.subr.bf16.mxu0 0
  %511 = vmatpush1.bf16.msra.mxu0 0
  %512 = vmatprep.mubr.bf16.mxu0 0
  %513 = vmatmul.mubr.bf16.gmra.mrb[0].mxu0 %v378
  %v514 = vpop.f32.mrb[0].mxu0
  %v515 = vadd.f32 0.0, %v514
  %v516 = vpop.f32.mrb[0].mxu0
  %v517 = vadd.f32 0.0, %v516
  %v518 = vpop.f32.mrb[0].mxu0
  %v519 = vadd.f32 0.0, %v518
  %v520 = vpop.f32.mrb[0].mxu0
  %v521 = vadd.f32 0.0, %v520
  %522 = vmatprep.mubr.bf16.mxu0 0
  %523 = vmatmul.mubr.bf16.gmra.mrb[0].mxu0 %v379
  %v524 = vpop.f32.mrb[0].mxu0
  %v525 = vadd.f32 0.0, %v524
  %v526 = vpop.f32.mrb[0].mxu0
  %v527 = vadd.f32 0.0, %v526
  %v528 = vpop.f32.mrb[0].mxu0
  %v529 = vadd.f32 0.0, %v528
  %v530 = vpop.f32.mrb[0].mxu0
  %v531 = vadd.f32 0.0, %v530
  %532 = vmatprep.mubr.bf16.mxu0 0
  %533 = vmatmul.mubr.bf16.gmra.mrb[0].mxu0 %v380
  %v534 = vpop.f32.mrb[0].mxu0
  %v535 = vadd.f32 0.0, %v534
  %v536 = vpop.f32.mrb[0].mxu0
  %v537 = vadd.f32 0.0, %v536
  %v538 = vpop.f32.mrb[0].mxu0
  %v539 = vadd.f32 0.0, %v538
  %v540 = vpop.f32.mrb[0].mxu0
  %v541 = vadd.f32 0.0, %v540
  %542 = vmatprep.mubr.bf16.mxu0 0
  %543 = vmatmul.mubr.bf16.gmra.mrb[0].mxu0 %v381
  %v544 = vpop.f32.mrb[0].mxu0
  %v545 = vadd.f32 0.0, %v544
  %v546 = vpop.f32.mrb[0].mxu0
  %v547 = vadd.f32 0.0, %v546
  %v548 = vpop.f32.mrb[0].mxu0
  %v549 = vadd.f32 0.0, %v548
  %v550 = vpop.f32.mrb[0].mxu0
  %v551 = vadd.f32 0.0, %v550
  %552 = vmatprep.mubr.bf16.mxu0 0
  %553 = vmatmul.mubr.bf16.gmra.mrb[0].mxu0 %v382
  %v554 = vpop.f32.mrb[0].mxu0
  %v555 = vadd.f32 0.0, %v554
  %v556 = vpop.f32.mrb[0].mxu0
  %v557 = vadd.f32 0.0, %v556
  %v558 = vpop.f32.mrb[0].mxu0
  %v559 = vadd.f32 0.0, %v558
  %v560 = vpop.f32.mrb[0].mxu0
  %v561 = vadd.f32 0.0, %v560
  %562 = vmatprep.mubr.bf16.mxu0 0
  %563 = vmatmul.mubr.bf16.gmra.mrb[0].mxu0 %v383
  %v564 = vpop.f32.mrb[0].mxu0
  %v565 = vadd.f32 0.0, %v564
  %v566 = vpop.f32.mrb[0].mxu0
  %v567 = vadd.f32 0.0, %v566
  %v568 = vpop.f32.mrb[0].mxu0
  %v569 = vadd.f32 0.0, %v568
  %v570 = vpop.f32.mrb[0].mxu0
  %v571 = vadd.f32 0.0, %v570
  %572 = vdwg.mxu0
  %v573 = vadd.f32 %v515, %v519
  %v574 = vadd.f32 %v517, %v521
  %v575 = vadd.f32 %v573, %v525
  %v576 = vadd.f32 %v574, %v527
  %v577 = vadd.f32 %v575, %v529
  %v578 = vadd.f32 %v576, %v531
  %v579 = vadd.f32 %v577, %v535
  %v580 = vadd.f32 %v578, %v537
  %v581 = vadd.f32 %v579, %v539
  %v582 = vadd.f32 %v580, %v541
  %v583 = vadd.f32 %v581, %v545
  %v584 = vadd.f32 %v582, %v547
  %v585 = vadd.f32 %v583, %v549
  %v586 = vadd.f32 %v584, %v551
  %v587 = vadd.f32 %v585, %v555
  %v588 = vadd.f32 %v586, %v557
  %v589 = vadd.f32 %v587, %v559
  %v590 = vadd.f32 %v588, %v561
  %v591 = vadd.f32 %v589, %v565
  %v592 = vadd.f32 %v590, %v567
  %v593 = vadd.f32 %v591, %v569
  %v594 = vadd.f32 %v592, %v571
  %v595 = vmul.f32 %v593, 0.083333336
  %v596 = vmul.f32 %v594, 0.083333336
  %v597 = vadd.f32 %v189, %v191
  %598 = vadd.xlane.f32.xlu0 %v597
  %v599 = vpop.xlane.xlu0 %598
  %v600 = vadd.f32 %v595, %v596
  %601 = vadd.xlane.f32.xlu0 %v600
  %v602 = vpop.xlane.xlu0 %601
  %v603 = vadd.f32 %v599, %v602
  %v604 = vmul.f32 %v189, %v189
  %v605 = vmul.f32 %v191, %v191
  %v606 = vadd.f32 %v604, %v605
  %607 = vadd.xlane.f32.xlu0 %v606
  %v608 = vpop.xlane.xlu0 %607
  %v609 = vmul.f32 %v595, %v595
  %v610 = vmul.f32 %v596, %v596
  %v611 = vadd.f32 %v609, %v610
  %612 = vadd.xlane.f32.xlu0 %v611
  %v613 = vpop.xlane.xlu0 %612
  %v614 = vadd.f32 %v608, %v613
  %v615 = vmul.f32 %v603, 0.001953125
  %v616 = vmul.f32 %v614, 0.001953125
  %v617 = vmul.f32 %v615, %v615
  %v618 = vsub.f32 %v616, %v617
  %v619 = vadd.f32 %v618, 1e-05
  %v620 = vrsqrt.pop %v619
  %v621 = vsub.f32 %v189, %v615
  %v622 = vsub.f32 %v191, %v615
  %v623 = vmul.f32 %v621, %v620
  %v624 = vmul.f32 %v622, %v620
  %v625 = vld [vmem:[%s5] sm:$0x3]
  %v627 = vlaneseq
  %v628 = vshrl.u32 %v627, 7
  %v629 = vsub.s32 0, %v628
  %v630 = vrot.slane %v625, %v629
  %v631 = vlaneseq
  %v632 = vshrl.u32 %v631, 7
  %v633 = vsub.s32 1, %v632
  %v634 = vrot.slane %v625, %v633
  %v637 = vmul.f32 %v623, %v630
  %v638 = vmul.f32 %v624, %v634
  %v639 = vld [vmem:[%s6] sm:$0x3]
  %v641 = vlaneseq
  %v642 = vshrl.u32 %v641, 7
  %v643 = vsub.s32 0, %v642
  %v644 = vrot.slane %v639, %v643
  %v645 = vlaneseq
  %v646 = vshrl.u32 %v645, 7
  %v647 = vsub.s32 1, %v646
  %v648 = vrot.slane %v639, %v647
  %v651 = vadd.f32 %v637, %v644
  %v652 = vadd.f32 %v638, %v648
  %v653 = vmax.f32 %v651, 0.0
  %v654 = vmax.f32 %v652, 0.0
  %v655 = vsub.f32 %v595, %v615
  %v656 = vsub.f32 %v596, %v615
  %v657 = vmul.f32 %v655, %v620
  %v658 = vmul.f32 %v656, %v620
  %v659 = vld [vmem:[%s7] sm:$0x3]
  %v661 = vlaneseq
  %v662 = vshrl.u32 %v661, 7
  %v663 = vsub.s32 0, %v662
  %v664 = vrot.slane %v659, %v663
  %v665 = vlaneseq
  %v666 = vshrl.u32 %v665, 7
  %v667 = vsub.s32 1, %v666
  %v668 = vrot.slane %v659, %v667
  %v671 = vmul.f32 %v657, %v664
  %v672 = vmul.f32 %v658, %v668
  %v673 = vld [vmem:[%s8] sm:$0x3]
  %v675 = vlaneseq
  %v676 = vshrl.u32 %v675, 7
  %v677 = vsub.s32 0, %v676
  %v678 = vrot.slane %v673, %v677
  %v679 = vlaneseq
  %v680 = vshrl.u32 %v679, 7
  %v681 = vsub.s32 1, %v680
  %v682 = vrot.slane %v673, %v681
  %v685 = vadd.f32 %v671, %v678
  %v686 = vadd.f32 %v672, %v682
  %v687 = vmax.f32 %v685, 0.0
  %v688 = vmax.f32 %v686, 0.0
  %v689 = vpack.c.bf16 %v653, %v653
  %v690 = vpack.c.bf16 %v654, %v654
  %v691 = vld [vmem:[%s9] sm:$0xff]
  %v692 = vld [vmem:[%s9 + $0x8] sm:$0xff]
  %v693 = vld [vmem:[%s9 + $0x10] sm:$0xff]
  %v694 = vld [vmem:[%s9 + $0x18] sm:$0xff]
  %v695 = vld [vmem:[%s9 + $0x20] sm:$0xff]
  %v696 = vld [vmem:[%s9 + $0x28] sm:$0xff]
  %v697 = vld [vmem:[%s9 + $0x30] sm:$0xff]
  %v698 = vld [vmem:[%s9 + $0x38] sm:$0xff]
  %v699 = vld [vmem:[%s9 + $0x40] sm:$0xff]
  %v700 = vld [vmem:[%s9 + $0x48] sm:$0xff]
  %v701 = vld [vmem:[%s9 + $0x50] sm:$0xff]
  %v702 = vld [vmem:[%s9 + $0x58] sm:$0xff]
  %v703 = vld [vmem:[%s9 + $0x60] sm:$0xff]
  %v704 = vld [vmem:[%s9 + $0x68] sm:$0xff]
  %v705 = vld [vmem:[%s9 + $0x70] sm:$0xff]
  %v706 = vld [vmem:[%s9 + $0x78] sm:$0xff]
  %v707 = vld [vmem:[%s9 + $0x80] sm:$0xff]
  %v708 = vld [vmem:[%s9 + $0x88] sm:$0xff]
  %v709 = vld [vmem:[%s9 + $0x90] sm:$0xff]
  %v710 = vld [vmem:[%s9 + $0x98] sm:$0xff]
  %v711 = vld [vmem:[%s9 + $0xa0] sm:$0xff]
  %v712 = vld [vmem:[%s9 + $0xa8] sm:$0xff]
  %v713 = vld [vmem:[%s9 + $0xb0] sm:$0xff]
  %v714 = vld [vmem:[%s9 + $0xb8] sm:$0xff]
  %v715 = vld [vmem:[%s9 + $0xc0] sm:$0xff]
  %v716 = vld [vmem:[%s9 + $0xc8] sm:$0xff]
  %v717 = vld [vmem:[%s9 + $0xd0] sm:$0xff]
  %v718 = vld [vmem:[%s9 + $0xd8] sm:$0xff]
  %v719 = vld [vmem:[%s9 + $0xe0] sm:$0xff]
  %v720 = vld [vmem:[%s9 + $0xe8] sm:$0xff]
  %v721 = vld [vmem:[%s9 + $0xf0] sm:$0xff]
  %v722 = vld [vmem:[%s9 + $0xf8] sm:$0xff]
  %v723 = vpack.c.bf16 %v687, %v687
  %v724 = vpack.c.bf16 %v688, %v688
  %v725 = vld [vmem:[%s10] sm:$0xff]
  %v726 = vld [vmem:[%s10 + $0x8] sm:$0xff]
  %v727 = vld [vmem:[%s10 + $0x10] sm:$0xff]
  %v728 = vld [vmem:[%s10 + $0x18] sm:$0xff]
  %v729 = vld [vmem:[%s10 + $0x20] sm:$0xff]
  %v730 = vld [vmem:[%s10 + $0x28] sm:$0xff]
  %v731 = vld [vmem:[%s10 + $0x30] sm:$0xff]
  %v732 = vld [vmem:[%s10 + $0x38] sm:$0xff]
  %v733 = vld [vmem:[%s10 + $0x40] sm:$0xff]
  %v734 = vld [vmem:[%s10 + $0x48] sm:$0xff]
  %v735 = vld [vmem:[%s10 + $0x50] sm:$0xff]
  %v736 = vld [vmem:[%s10 + $0x58] sm:$0xff]
  %v737 = vld [vmem:[%s10 + $0x60] sm:$0xff]
  %v738 = vld [vmem:[%s10 + $0x68] sm:$0xff]
  %v739 = vld [vmem:[%s10 + $0x70] sm:$0xff]
  %v740 = vld [vmem:[%s10 + $0x78] sm:$0xff]
  %v741 = vld [vmem:[%s10 + $0x80] sm:$0xff]
  %v742 = vld [vmem:[%s10 + $0x88] sm:$0xff]
  %v743 = vld [vmem:[%s10 + $0x90] sm:$0xff]
  %v744 = vld [vmem:[%s10 + $0x98] sm:$0xff]
  %v745 = vld [vmem:[%s10 + $0xa0] sm:$0xff]
  %v746 = vld [vmem:[%s10 + $0xa8] sm:$0xff]
  %v747 = vld [vmem:[%s10 + $0xb0] sm:$0xff]
  %v748 = vld [vmem:[%s10 + $0xb8] sm:$0xff]
  %v749 = vld [vmem:[%s10 + $0xc0] sm:$0xff]
  %v750 = vld [vmem:[%s10 + $0xc8] sm:$0xff]
  %v751 = vld [vmem:[%s10 + $0xd0] sm:$0xff]
  %v752 = vld [vmem:[%s10 + $0xd8] sm:$0xff]
  %v753 = vld [vmem:[%s10 + $0xe0] sm:$0xff]
  %v754 = vld [vmem:[%s10 + $0xe8] sm:$0xff]
  %v755 = vld [vmem:[%s10 + $0xf0] sm:$0xff]
  %v756 = vld [vmem:[%s10 + $0xf8] sm:$0xff]
  %v789 = vunpack.c.l.b16 %v725
  %v790 = vunpack.c.h.b16 %v725
  %v791 = vunpack.c.l.b16 %v726
  %v792 = vunpack.c.h.b16 %v726
  %v793 = vunpack.c.l.b16 %v727
  %v794 = vunpack.c.h.b16 %v727
  %v795 = vunpack.c.l.b16 %v728
  %v796 = vunpack.c.h.b16 %v728
  %v797 = vunpack.c.l.b16 %v729
  %v798 = vunpack.c.h.b16 %v729
  %v799 = vunpack.c.l.b16 %v730
  %v800 = vunpack.c.h.b16 %v730
  %v801 = vunpack.c.l.b16 %v731
  %v802 = vunpack.c.h.b16 %v731
  %v803 = vunpack.c.l.b16 %v732
  %v804 = vunpack.c.h.b16 %v732
  %v805 = vunpack.c.l.b16 %v733
  %v806 = vunpack.c.h.b16 %v733
  %v807 = vunpack.c.l.b16 %v734
  %v808 = vunpack.c.h.b16 %v734
  %v809 = vunpack.c.l.b16 %v735
  %v810 = vunpack.c.h.b16 %v735
  %v811 = vunpack.c.l.b16 %v736
  %v812 = vunpack.c.h.b16 %v736
  %v813 = vunpack.c.l.b16 %v737
  %v814 = vunpack.c.h.b16 %v737
  %v815 = vunpack.c.l.b16 %v738
  %v816 = vunpack.c.h.b16 %v738
  %v817 = vunpack.c.l.b16 %v739
  %v818 = vunpack.c.h.b16 %v739
  %v819 = vunpack.c.l.b16 %v740
  %v820 = vunpack.c.h.b16 %v740
  %v821 = vunpack.c.l.b16 %v741
  %v822 = vunpack.c.h.b16 %v741
  %v823 = vunpack.c.l.b16 %v742
  %v824 = vunpack.c.h.b16 %v742
  %v825 = vunpack.c.l.b16 %v743
  %v826 = vunpack.c.h.b16 %v743
  %v827 = vunpack.c.l.b16 %v744
  %v828 = vunpack.c.h.b16 %v744
  %v829 = vunpack.c.l.b16 %v745
  %v830 = vunpack.c.h.b16 %v745
  %v831 = vunpack.c.l.b16 %v746
  %v832 = vunpack.c.h.b16 %v746
  %v833 = vunpack.c.l.b16 %v747
  %v834 = vunpack.c.h.b16 %v747
  %v835 = vunpack.c.l.b16 %v748
  %v836 = vunpack.c.h.b16 %v748
  %v837 = vunpack.c.l.b16 %v749
  %v838 = vunpack.c.h.b16 %v749
  %v839 = vunpack.c.l.b16 %v750
  %v840 = vunpack.c.h.b16 %v750
  %v841 = vunpack.c.l.b16 %v751
  %v842 = vunpack.c.h.b16 %v751
  %v843 = vunpack.c.l.b16 %v752
  %v844 = vunpack.c.h.b16 %v752
  %v845 = vunpack.c.l.b16 %v753
  %v846 = vunpack.c.h.b16 %v753
  %v847 = vunpack.c.l.b16 %v754
  %v848 = vunpack.c.h.b16 %v754
  %v849 = vunpack.c.l.b16 %v755
  %v850 = vunpack.c.h.b16 %v755
  %v851 = vunpack.c.l.b16 %v756
  %v852 = vunpack.c.h.b16 %v756
  %v853 = vpack.c.b16 %v791, %v789
  %v854 = vpack.c.b16 %v792, %v790
  %v855 = vpack.c.b16 %v795, %v793
  %v856 = vpack.c.b16 %v796, %v794
  %v857 = vpack.c.b16 %v799, %v797
  %v858 = vpack.c.b16 %v800, %v798
  %v859 = vpack.c.b16 %v803, %v801
  %v860 = vpack.c.b16 %v804, %v802
  %v861 = vpack.c.b16 %v807, %v805
  %v862 = vpack.c.b16 %v808, %v806
  %v863 = vpack.c.b16 %v811, %v809
  %v864 = vpack.c.b16 %v812, %v810
  %v865 = vpack.c.b16 %v815, %v813
  %v866 = vpack.c.b16 %v816, %v814
  %v867 = vpack.c.b16 %v819, %v817
  %v868 = vpack.c.b16 %v820, %v818
  %v869 = vpack.c.b16 %v823, %v821
  %v870 = vpack.c.b16 %v824, %v822
  %v871 = vpack.c.b16 %v827, %v825
  %v872 = vpack.c.b16 %v828, %v826
  %v873 = vpack.c.b16 %v831, %v829
  %v874 = vpack.c.b16 %v832, %v830
  %v875 = vpack.c.b16 %v835, %v833
  %v876 = vpack.c.b16 %v836, %v834
  %v877 = vpack.c.b16 %v839, %v837
  %v878 = vpack.c.b16 %v840, %v838
  %v879 = vpack.c.b16 %v843, %v841
  %v880 = vpack.c.b16 %v844, %v842
  %v881 = vpack.c.b16 %v847, %v845
  %v882 = vpack.c.b16 %v848, %v846
  %v883 = vpack.c.b16 %v851, %v849
  %v884 = vpack.c.b16 %v852, %v850
  %917 = vmatprep.subr.bf16.mxu0 %v854
  %918 = vmatpush1.bf16.msra.mxu0 %v853
  %919 = vmatprep.subr.bf16.mxu0 %v856
  %920 = vmatpush1.bf16.msra.mxu0 %v855
  %921 = vmatprep.subr.bf16.mxu0 %v858
  %922 = vmatpush1.bf16.msra.mxu0 %v857
  %923 = vmatprep.subr.bf16.mxu0 %v860
  %924 = vmatpush1.bf16.msra.mxu0 %v859
  %925 = vmatprep.subr.bf16.mxu0 %v862
  %926 = vmatpush1.bf16.msra.mxu0 %v861
  %927 = vmatprep.subr.bf16.mxu0 %v864
  %928 = vmatpush1.bf16.msra.mxu0 %v863
  %929 = vmatprep.subr.bf16.mxu0 %v866
  %930 = vmatpush1.bf16.msra.mxu0 %v865
  %931 = vmatprep.subr.bf16.mxu0 %v868
  %932 = vmatpush1.bf16.msra.mxu0 %v867
  %933 = vmatprep.subr.bf16.mxu0 %v870
  %934 = vmatpush1.bf16.msra.mxu0 %v869
  %935 = vmatprep.subr.bf16.mxu0 %v872
  %936 = vmatpush1.bf16.msra.mxu0 %v871
  %937 = vmatprep.subr.bf16.mxu0 %v874
  %938 = vmatpush1.bf16.msra.mxu0 %v873
  %939 = vmatprep.subr.bf16.mxu0 %v876
  %940 = vmatpush1.bf16.msra.mxu0 %v875
  %941 = vmatprep.subr.bf16.mxu0 %v878
  %942 = vmatpush1.bf16.msra.mxu0 %v877
  %943 = vmatprep.subr.bf16.mxu0 %v880
  %944 = vmatpush1.bf16.msra.mxu0 %v879
  %945 = vmatprep.subr.bf16.mxu0 %v882
  %946 = vmatpush1.bf16.msra.mxu0 %v881
  %947 = vmatprep.subr.bf16.mxu0 %v884
  %948 = vmatpush1.bf16.msra.mxu0 %v883
  %949 = vmatprep.mubr.bf16.mxu0 %v724
  %950 = vmatmul.mubr.bf16.gmra.mrb[0].mxu0 %v723
  %v951 = vpop.f32.mrb[0].mxu0
  %v952 = vadd.f32 0.0, %v951
  %v953 = vpop.f32.mrb[0].mxu0
  %v954 = vadd.f32 0.0, %v953
  %v955 = vpop.f32.mrb[0].mxu0
  %v956 = vpop.f32.mrb[0].mxu0
  %957 = vdwg.mxu0
  %v990 = vunpack.c.l.b16 %v691
  %v991 = vunpack.c.h.b16 %v691
  %v992 = vunpack.c.l.b16 %v692
  %v993 = vunpack.c.h.b16 %v692
  %v994 = vunpack.c.l.b16 %v693
  %v995 = vunpack.c.h.b16 %v693
  %v996 = vunpack.c.l.b16 %v694
  %v997 = vunpack.c.h.b16 %v694
  %v998 = vunpack.c.l.b16 %v695
  %v999 = vunpack.c.h.b16 %v695
  %v1000 = vunpack.c.l.b16 %v696
  %v1001 = vunpack.c.h.b16 %v696
  %v1002 = vunpack.c.l.b16 %v697
  %v1003 = vunpack.c.h.b16 %v697
  %v1004 = vunpack.c.l.b16 %v698
  %v1005 = vunpack.c.h.b16 %v698
  %v1006 = vunpack.c.l.b16 %v699
  %v1007 = vunpack.c.h.b16 %v699
  %v1008 = vunpack.c.l.b16 %v700
  %v1009 = vunpack.c.h.b16 %v700
  %v1010 = vunpack.c.l.b16 %v701
  %v1011 = vunpack.c.h.b16 %v701
  %v1012 = vunpack.c.l.b16 %v702
  %v1013 = vunpack.c.h.b16 %v702
  %v1014 = vunpack.c.l.b16 %v703
  %v1015 = vunpack.c.h.b16 %v703
  %v1016 = vunpack.c.l.b16 %v704
  %v1017 = vunpack.c.h.b16 %v704
  %v1018 = vunpack.c.l.b16 %v705
  %v1019 = vunpack.c.h.b16 %v705
  %v1020 = vunpack.c.l.b16 %v706
  %v1021 = vunpack.c.h.b16 %v706
  %v1022 = vunpack.c.l.b16 %v707
  %v1023 = vunpack.c.h.b16 %v707
  %v1024 = vunpack.c.l.b16 %v708
  %v1025 = vunpack.c.h.b16 %v708
  %v1026 = vunpack.c.l.b16 %v709
  %v1027 = vunpack.c.h.b16 %v709
  %v1028 = vunpack.c.l.b16 %v710
  %v1029 = vunpack.c.h.b16 %v710
  %v1030 = vunpack.c.l.b16 %v711
  %v1031 = vunpack.c.h.b16 %v711
  %v1032 = vunpack.c.l.b16 %v712
  %v1033 = vunpack.c.h.b16 %v712
  %v1034 = vunpack.c.l.b16 %v713
  %v1035 = vunpack.c.h.b16 %v713
  %v1036 = vunpack.c.l.b16 %v714
  %v1037 = vunpack.c.h.b16 %v714
  %v1038 = vunpack.c.l.b16 %v715
  %v1039 = vunpack.c.h.b16 %v715
  %v1040 = vunpack.c.l.b16 %v716
  %v1041 = vunpack.c.h.b16 %v716
  %v1042 = vunpack.c.l.b16 %v717
  %v1043 = vunpack.c.h.b16 %v717
  %v1044 = vunpack.c.l.b16 %v718
  %v1045 = vunpack.c.h.b16 %v718
  %v1046 = vunpack.c.l.b16 %v719
  %v1047 = vunpack.c.h.b16 %v719
  %v1048 = vunpack.c.l.b16 %v720
  %v1049 = vunpack.c.h.b16 %v720
  %v1050 = vunpack.c.l.b16 %v721
  %v1051 = vunpack.c.h.b16 %v721
  %v1052 = vunpack.c.l.b16 %v722
  %v1053 = vunpack.c.h.b16 %v722
  %v1054 = vpack.c.b16 %v992, %v990
  %v1055 = vpack.c.b16 %v993, %v991
  %v1056 = vpack.c.b16 %v996, %v994
  %v1057 = vpack.c.b16 %v997, %v995
  %v1058 = vpack.c.b16 %v1000, %v998
  %v1059 = vpack.c.b16 %v1001, %v999
  %v1060 = vpack.c.b16 %v1004, %v1002
  %v1061 = vpack.c.b16 %v1005, %v1003
  %v1062 = vpack.c.b16 %v1008, %v1006
  %v1063 = vpack.c.b16 %v1009, %v1007
  %v1064 = vpack.c.b16 %v1012, %v1010
  %v1065 = vpack.c.b16 %v1013, %v1011
  %v1066 = vpack.c.b16 %v1016, %v1014
  %v1067 = vpack.c.b16 %v1017, %v1015
  %v1068 = vpack.c.b16 %v1020, %v1018
  %v1069 = vpack.c.b16 %v1021, %v1019
  %v1070 = vpack.c.b16 %v1024, %v1022
  %v1071 = vpack.c.b16 %v1025, %v1023
  %v1072 = vpack.c.b16 %v1028, %v1026
  %v1073 = vpack.c.b16 %v1029, %v1027
  %v1074 = vpack.c.b16 %v1032, %v1030
  %v1075 = vpack.c.b16 %v1033, %v1031
  %v1076 = vpack.c.b16 %v1036, %v1034
  %v1077 = vpack.c.b16 %v1037, %v1035
  %v1078 = vpack.c.b16 %v1040, %v1038
  %v1079 = vpack.c.b16 %v1041, %v1039
  %v1080 = vpack.c.b16 %v1044, %v1042
  %v1081 = vpack.c.b16 %v1045, %v1043
  %v1082 = vpack.c.b16 %v1048, %v1046
  %v1083 = vpack.c.b16 %v1049, %v1047
  %v1084 = vpack.c.b16 %v1052, %v1050
  %v1085 = vpack.c.b16 %v1053, %v1051
  %1118 = vmatprep.subr.bf16.mxu0 %v1055
  %1119 = vmatpush1.bf16.msra.mxu0 %v1054
  %1120 = vmatprep.subr.bf16.mxu0 %v1057
  %1121 = vmatpush1.bf16.msra.mxu0 %v1056
  %1122 = vmatprep.subr.bf16.mxu0 %v1059
  %1123 = vmatpush1.bf16.msra.mxu0 %v1058
  %1124 = vmatprep.subr.bf16.mxu0 %v1061
  %1125 = vmatpush1.bf16.msra.mxu0 %v1060
  %1126 = vmatprep.subr.bf16.mxu0 %v1063
  %1127 = vmatpush1.bf16.msra.mxu0 %v1062
  %1128 = vmatprep.subr.bf16.mxu0 %v1065
  %1129 = vmatpush1.bf16.msra.mxu0 %v1064
  %1130 = vmatprep.subr.bf16.mxu0 %v1067
  %1131 = vmatpush1.bf16.msra.mxu0 %v1066
  %1132 = vmatprep.subr.bf16.mxu0 %v1069
  %1133 = vmatpush1.bf16.msra.mxu0 %v1068
  %1134 = vmatprep.subr.bf16.mxu0 %v1071
  %1135 = vmatpush1.bf16.msra.mxu0 %v1070
  %1136 = vmatprep.subr.bf16.mxu0 %v1073
  %1137 = vmatpush1.bf16.msra.mxu0 %v1072
  %1138 = vmatprep.subr.bf16.mxu0 %v1075
  %1139 = vmatpush1.bf16.msra.mxu0 %v1074
  %1140 = vmatprep.subr.bf16.mxu0 %v1077
  %1141 = vmatpush1.bf16.msra.mxu0 %v1076
  %1142 = vmatprep.subr.bf16.mxu0 %v1079
  %1143 = vmatpush1.bf16.msra.mxu0 %v1078
  %1144 = vmatprep.subr.bf16.mxu0 %v1081
  %1145 = vmatpush1.bf16.msra.mxu0 %v1080
  %1146 = vmatprep.subr.bf16.mxu0 %v1083
  %1147 = vmatpush1.bf16.msra.mxu0 %v1082
  %1148 = vmatprep.subr.bf16.mxu0 %v1085
  %1149 = vmatpush1.bf16.msra.mxu0 %v1084
  %1150 = vmatprep.mubr.bf16.mxu0 %v690
  %1151 = vmatmul.mubr.bf16.gmra.mrb[0].mxu0 %v689
  %v1152 = vpop.f32.mrb[0].mxu0
  %v1153 = vadd.f32 %v952, %v1152
  %v1154 = vpop.f32.mrb[0].mxu0
  %v1155 = vadd.f32 %v954, %v1154
  %v1156 = vpop.f32.mrb[0].mxu0
  %v1157 = vpop.f32.mrb[0].mxu0
  %1158 = vdwg.mxu0
  %v1159 = vld [vmem:[%s11] sm:$0x3]
  %v1161 = vlaneseq
  %v1162 = vshrl.u32 %v1161, 7
  %v1163 = vsub.s32 0, %v1162
  %v1164 = vrot.slane %v1159, %v1163
  %v1165 = vlaneseq
  %v1166 = vshrl.u32 %v1165, 7
  %v1167 = vsub.s32 1, %v1166
  %v1168 = vrot.slane %v1159, %v1167
  %v1171 = vadd.f32 %v1153, %v1164
  %v1172 = vadd.f32 %v1155, %v1168
  %v1173 = vadd.f32 %v1171, %v1172
  %1174 = vadd.xlane.f32.xlu0 %v1173
  %v1175 = vpop.xlane.xlu0 %1174
  %v1176 = vrcp.pop 256.0
  %v1177 = vmul.f32 %v1175, %v1176
  %v1178 = vsub.f32 %v1171, %v1177
  %v1179 = vsub.f32 %v1172, %v1177
  %v1180 = vmul.f32 %v1178, %v1178
  %v1181 = vmul.f32 %v1179, %v1179
  %v1182 = vadd.f32 %v1180, %v1181
  %1183 = vadd.xlane.f32.xlu0 %v1182
  %v1184 = vpop.xlane.xlu0 %1183
  %v1185 = vmul.f32 %v1184, %v1176
  %v1186 = vadd.f32 %v1185, 1e-05
  %v1187 = vrsqrt.pop %v1186
  %v1188 = vmul.f32 %v1178, %v1187
  %v1189 = vmul.f32 %v1179, %v1187
  %v1190 = vld [vmem:[%s12] sm:$0x3]
  %v1192 = vlaneseq
  %v1193 = vshrl.u32 %v1192, 7
  %v1194 = vsub.s32 0, %v1193
  %v1195 = vrot.slane %v1190, %v1194
  %v1196 = vlaneseq
  %v1197 = vshrl.u32 %v1196, 7
  %v1198 = vsub.s32 1, %v1197
  %v1199 = vrot.slane %v1190, %v1198
  %v1202 = vmul.f32 %v1188, %v1195
  %v1203 = vmul.f32 %v1189, %v1199
  %v1204 = vld [vmem:[%s13] sm:$0x3]
  %v1206 = vlaneseq
  %v1207 = vshrl.u32 %v1206, 7
  %v1208 = vsub.s32 0, %v1207
  %v1209 = vrot.slane %v1204, %v1208
  %v1210 = vlaneseq
  %v1211 = vshrl.u32 %v1210, 7
  %v1212 = vsub.s32 1, %v1211
  %v1213 = vrot.slane %v1204, %v1212
  %v1216 = vadd.f32 %v1202, %v1209
  %v1217 = vadd.f32 %v1203, %v1213
  %v1218 = vmax.f32 %v1216, 0.0
  %v1219 = vmax.f32 %v1217, 0.0
  %v1220 = vpack.c.bf16 %v1218, %v1218
  %v1221 = vpack.c.bf16 %v1219, %v1219
  %v1222 = vld [vmem:[%s14] sm:$0xf]
  %v1223 = vld [vmem:[%s14 + $0x4] sm:$0xf]
  %v1224 = vld [vmem:[%s14 + $0x8] sm:$0xf]
  %v1225 = vld [vmem:[%s14 + $0xc] sm:$0xf]
  %v1226 = vld [vmem:[%s14 + $0x10] sm:$0xf]
  %v1227 = vld [vmem:[%s14 + $0x14] sm:$0xf]
  %v1228 = vld [vmem:[%s14 + $0x18] sm:$0xf]
  %v1229 = vld [vmem:[%s14 + $0x1c] sm:$0xf]
  %v1230 = vld [vmem:[%s14 + $0x20] sm:$0xf]
  %v1231 = vld [vmem:[%s14 + $0x24] sm:$0xf]
  %v1232 = vld [vmem:[%s14 + $0x28] sm:$0xf]
  %v1233 = vld [vmem:[%s14 + $0x2c] sm:$0xf]
  %v1234 = vld [vmem:[%s14 + $0x30] sm:$0xf]
  %v1235 = vld [vmem:[%s14 + $0x34] sm:$0xf]
  %v1236 = vld [vmem:[%s14 + $0x38] sm:$0xf]
  %v1237 = vld [vmem:[%s14 + $0x3c] sm:$0xf]
  %v1238 = vld [vmem:[%s14 + $0x40] sm:$0xf]
  %v1239 = vld [vmem:[%s14 + $0x44] sm:$0xf]
  %v1240 = vld [vmem:[%s14 + $0x48] sm:$0xf]
  %v1241 = vld [vmem:[%s14 + $0x4c] sm:$0xf]
  %v1242 = vld [vmem:[%s14 + $0x50] sm:$0xf]
  %v1243 = vld [vmem:[%s14 + $0x54] sm:$0xf]
  %v1244 = vld [vmem:[%s14 + $0x58] sm:$0xf]
  %v1245 = vld [vmem:[%s14 + $0x5c] sm:$0xf]
  %v1246 = vld [vmem:[%s14 + $0x60] sm:$0xf]
  %v1247 = vld [vmem:[%s14 + $0x64] sm:$0xf]
  %v1248 = vld [vmem:[%s14 + $0x68] sm:$0xf]
  %v1249 = vld [vmem:[%s14 + $0x6c] sm:$0xf]
  %v1250 = vld [vmem:[%s14 + $0x70] sm:$0xf]
  %v1251 = vld [vmem:[%s14 + $0x74] sm:$0xf]
  %v1252 = vld [vmem:[%s14 + $0x78] sm:$0xf]
  %v1253 = vld [vmem:[%s14 + $0x7c] sm:$0xf]
  %v1254 = vld [vmem:[%s15] sm:$0x1]
  %v1256 = vlaneseq
  %v1257 = vshrl.u32 %v1256, 7
  %v1258 = vsub.s32 0, %v1257
  %v1259 = vrot.slane %v1254, %v1258
  %v1293 = vunpack.c.l.b16 %v1222
  %v1294 = vunpack.c.l.b16 %v1223
  %v1295 = vunpack.c.l.b16 %v1224
  %v1296 = vunpack.c.l.b16 %v1225
  %v1297 = vunpack.c.l.b16 %v1226
  %v1298 = vunpack.c.l.b16 %v1227
  %v1299 = vunpack.c.l.b16 %v1228
  %v1300 = vunpack.c.l.b16 %v1229
  %v1301 = vunpack.c.l.b16 %v1230
  %v1302 = vunpack.c.l.b16 %v1231
  %v1303 = vunpack.c.l.b16 %v1232
  %v1304 = vunpack.c.l.b16 %v1233
  %v1305 = vunpack.c.l.b16 %v1234
  %v1306 = vunpack.c.l.b16 %v1235
  %v1307 = vunpack.c.l.b16 %v1236
  %v1308 = vunpack.c.l.b16 %v1237
  %v1309 = vunpack.c.l.b16 %v1238
  %v1310 = vunpack.c.l.b16 %v1239
  %v1311 = vunpack.c.l.b16 %v1240
  %v1312 = vunpack.c.l.b16 %v1241
  %v1313 = vunpack.c.l.b16 %v1242
  %v1314 = vunpack.c.l.b16 %v1243
  %v1315 = vunpack.c.l.b16 %v1244
  %v1316 = vunpack.c.l.b16 %v1245
  %v1317 = vunpack.c.l.b16 %v1246
  %v1318 = vunpack.c.l.b16 %v1247
  %v1319 = vunpack.c.l.b16 %v1248
  %v1320 = vunpack.c.l.b16 %v1249
  %v1321 = vunpack.c.l.b16 %v1250
  %v1322 = vunpack.c.l.b16 %v1251
  %v1323 = vunpack.c.l.b16 %v1252
  %v1324 = vunpack.c.l.b16 %v1253
  %v1325 = vpack.c.b16 %v1294, %v1293
  %v1326 = vpack.c.b16 %v1296, %v1295
  %v1327 = vpack.c.b16 %v1298, %v1297
  %v1328 = vpack.c.b16 %v1300, %v1299
  %v1329 = vpack.c.b16 %v1302, %v1301
  %v1330 = vpack.c.b16 %v1304, %v1303
  %v1331 = vpack.c.b16 %v1306, %v1305
  %v1332 = vpack.c.b16 %v1308, %v1307
  %v1333 = vpack.c.b16 %v1310, %v1309
  %v1334 = vpack.c.b16 %v1312, %v1311
  %v1335 = vpack.c.b16 %v1314, %v1313
  %v1336 = vpack.c.b16 %v1316, %v1315
  %v1337 = vpack.c.b16 %v1318, %v1317
  %v1338 = vpack.c.b16 %v1320, %v1319
  %v1339 = vpack.c.b16 %v1322, %v1321
  %v1340 = vpack.c.b16 %v1324, %v1323
  %1357 = vmatprep.subr.bf16.mxu0 0
  %1358 = vmatpush1.bf16.msra.mxu0 %v1325
  %1359 = vmatprep.subr.bf16.mxu0 0
  %1360 = vmatpush1.bf16.msra.mxu0 %v1326
  %1361 = vmatprep.subr.bf16.mxu0 0
  %1362 = vmatpush1.bf16.msra.mxu0 %v1327
  %1363 = vmatprep.subr.bf16.mxu0 0
  %1364 = vmatpush1.bf16.msra.mxu0 %v1328
  %1365 = vmatprep.subr.bf16.mxu0 0
  %1366 = vmatpush1.bf16.msra.mxu0 %v1329
  %1367 = vmatprep.subr.bf16.mxu0 0
  %1368 = vmatpush1.bf16.msra.mxu0 %v1330
  %1369 = vmatprep.subr.bf16.mxu0 0
  %1370 = vmatpush1.bf16.msra.mxu0 %v1331
  %1371 = vmatprep.subr.bf16.mxu0 0
  %1372 = vmatpush1.bf16.msra.mxu0 %v1332
  %1373 = vmatprep.subr.bf16.mxu0 0
  %1374 = vmatpush1.bf16.msra.mxu0 %v1333
  %1375 = vmatprep.subr.bf16.mxu0 0
  %1376 = vmatpush1.bf16.msra.mxu0 %v1334
  %1377 = vmatprep.subr.bf16.mxu0 0
  %1378 = vmatpush1.bf16.msra.mxu0 %v1335
  %1379 = vmatprep.subr.bf16.mxu0 0
  %1380 = vmatpush1.bf16.msra.mxu0 %v1336
  %1381 = vmatprep.subr.bf16.mxu0 0
  %1382 = vmatpush1.bf16.msra.mxu0 %v1337
  %1383 = vmatprep.subr.bf16.mxu0 0
  %1384 = vmatpush1.bf16.msra.mxu0 %v1338
  %1385 = vmatprep.subr.bf16.mxu0 0
  %1386 = vmatpush1.bf16.msra.mxu0 %v1339
  %1387 = vmatprep.subr.bf16.mxu0 0
  %1388 = vmatpush1.bf16.msra.mxu0 %v1340
  %1389 = vmatprep.mubr.bf16.mxu0 %v1221
  %1390 = vmatmul.mubr.bf16.gmra.mrb[0].mxu0 %v1220
  %v1391 = vpop.f32.mrb[0].mxu0
  %v1392 = vadd.f32 %v1259, %v1391
  %v1393 = vpop.f32.mrb[0].mxu0
  %v1394 = vpop.f32.mrb[0].mxu0
  %v1395 = vpop.f32.mrb[0].mxu0
  %1396 = vdwg.mxu0
  %1397 = vst [vmem:[%s17] sm:$0xff] %v1392
  // Predicated region
  $region66: #{moment_dino_forward.1} parent=0 // pred_check
    _
  $region67: #{moment_dino_forward.1} parent=0 // pred_check_branch
    %1399 = sbr.rel (0) target = $region69
  $region68: #{moment_dino_forward.1} parent=0 // pred_region
    _
  $region69: #{moment_dino_forward.1} parent=0 // pred_fallthru
    _
  // Predicated region
  $region70: #{moment_dino_forward.1} parent=0 // pred_check
    _
  $region71: #{moment_dino_forward.1} parent=0 // pred_check_branch
    %1401 = sbr.rel (0) target = $region73
  $region72: #{moment_dino_forward.1} parent=0 // pred_region
    _
  $region73: #{moment_dino_forward.1} parent=0 // pred_fallthru
    _
  // Predicated region
  $region74: #{moment_dino_forward.1} parent=0 // pred_check
    _
  $region75: #{moment_dino_forward.1} parent=0 // pred_check_branch
    %1403 = sbr.rel (0) target = $region77
  $region76: #{moment_dino_forward.1} parent=0 // pred_region
    _
  $region77: #{moment_dino_forward.1} parent=0 // pred_fallthru
    _
  // Predicated region
  $region78: #{moment_dino_forward.1} parent=0 // pred_check
    _
  $region79: #{moment_dino_forward.1} parent=0 // pred_check_branch
    %1405 = sbr.rel (0) target = $region81
  $region80: #{moment_dino_forward.1} parent=0 // pred_region
    _
  $region81: #{moment_dino_forward.1} parent=0 // pred_fallthru
    _

</llo_original>
